<compile_context>
chip_gen: v6e
topology: v6e:2x2x1
jax: 0.10.0
libtpu: 0.0.40
codegen_flags: <defaults>
</compile_context>

<pallas_src>
import jax
import jax.numpy as jnp
from jax import lax
from jax.experimental import pallas as pl
from jax.experimental.pallas import tpu as pltpu


def _round_up(x, m):
    return (x + m - 1) // m * m


# ----------------------------------------------------------------------------
# Phase 1 / Phase 3 kernel: time-parallel projection in the transposed layout.
#   out[t] = W (n_blk, K) @ x[t] (K, B) + b (n_blk, 1)
# Grid = (time chunks, output-row blocks), both parallel (v7x: both TensorCores).
# ----------------------------------------------------------------------------
def _time_proj_kernel(x_ref, w_ref, b_ref, o_ref):
    t_blk = x_ref.shape[0]

    def body(t, _):
        acc = jnp.dot(w_ref[...], x_ref[t], preferred_element_type=jnp.float32)
        o_ref[t] = (acc + b_ref[...]).astype(o_ref.dtype)
        return 0

    lax.fori_loop(0, t_blk, body, 0, unroll=True)


def time_proj(x_t, w, b, *, t_blk, n_blk=512, out_dtype=jnp.float32):
    """x_t: (T, K, B); w: (N, K); b: (N, 1) f32.  Returns (T, N, B) with
       out[t] = w @ x_t[t] + b.  T must be a multiple of t_blk (caller pads)."""
    T, K, B = x_t.shape
    N = w.shape[0]
    assert T % t_blk == 0
    n_blk = min(n_blk, N)
    if N % n_blk != 0:
        n_blk = N                     # TODO(synk): K-tiling for very large K (F) not needed here
    return pl.pallas_call(
        _time_proj_kernel,
        out_shape=jax.ShapeDtypeStruct((T, N, B), out_dtype),
        grid_spec=pltpu.PrefetchScalarGridSpec(
            num_scalar_prefetch=0,
            grid=(T // t_blk, N // n_blk),
            in_specs=[
                pl.BlockSpec((t_blk, K, B), lambda t, r: (t, 0, 0)),
                pl.BlockSpec((n_blk, K), lambda t, r: (r, 0)),
                pl.BlockSpec((n_blk, 1), lambda t, r: (r, 0)),
            ],
            out_specs=pl.BlockSpec((t_blk, n_blk, B), lambda t, r: (t, r, 0)),
        ),
        compiler_params=pltpu.CompilerParams(
            dimension_semantics=("parallel", "parallel"),
        ),
    )(x_t, w, b)


# ----------------------------------------------------------------------------
# Phase 2: sequential LSTM recurrence in transposed (feature-major) layout.
# ----------------------------------------------------------------------------
def _lstm_recurrence_kernel(gx_ref, whh_hbm, h_out_ref,
                            whh_vmem, h_scr, c_scr, dma_sem):
    # gx_ref:   (t_blk, 4*Hp, Bb)  precomputed input projection + fused bias (transposed)
    # whh_hbm:  (4*Hp, Hp)         W_hh left in HBM (pl.ANY); copied once into whh_vmem
    # h_out:    (t_blk, Hp, Bb)
    # h/c scr:  (Hp, Bb) f32, persist across time chunks
    @pl.when(pl.program_id(1) == 0)
    def _():
        # Single-buffered resident W_hh: one DMA at the first time chunk of each batch
        # block (instead of a double-buffered constant BlockSpec -> halves its VMEM).
        cp = pltpu.make_async_copy(whh_hbm, whh_vmem, dma_sem)
        cp.start()
        cp.wait()
        # h0 = c0 = 0 (PyTorch default when no initial hidden state is given).
        h_scr[...] = jnp.zeros_like(h_scr)
        c_scr[...] = jnp.zeros_like(c_scr)

    t_blk = gx_ref.shape[0]
    Hp = h_scr.shape[0]
    mm = whh_vmem.dtype   # MXU operand dtype (bf16 or f32)

    def step(t, carry):
        h, c = carry  # f32 (Hp, Bb)
        # Transposed recurrent matmul: W_hh (4Hp, Hp) @ h^T (Hp, Bb) -> (4Hp, Bb).
        # Streams 4Hp LHS rows per weight push (vs B rows in the (B,H)@(H,4H) layout),
        # so weight-push latency is amortized even for tiny batch.
        gates = gx_ref[t].astype(jnp.float32) + jnp.dot(
            whh_vmem[...], h.astype(mm), preferred_element_type=jnp.float32)
        # PyTorch gate order: input, forget, cell(g), output; slices are sublane-aligned
        # because each gate block was padded to Hp (multiple of 8).
        i_g = jax.nn.sigmoid(gates[0 * Hp:1 * Hp, :])
        f_g = jax.nn.sigmoid(gates[1 * Hp:2 * Hp, :])
        g_g = jnp.tanh(gates[2 * Hp:3 * Hp, :])
        o_g = jax.nn.sigmoid(gates[3 * Hp:4 * Hp, :])
        c_new = f_g * c + i_g * g_g
        h_new = o_g * jnp.tanh(c_new)
        h_out_ref[t] = h_new.astype(h_out_ref.dtype)
        return (h_new, c_new)

    # Partial unroll: LLO scheduling visibility without full-unroll vreg/i-cache blowup.
    h_fin, c_fin = lax.fori_loop(0, t_blk, step, (h_scr[...], c_scr[...]), unroll=4)
    h_scr[...] = h_fin
    c_scr[...] = c_fin


def lstm_forward(x, w_ih, w_hh, b_ih, b_hh, w_cls, b_cls, *,
                 t_blk=32, matmul_dtype=jnp.bfloat16):
    """x: (T, B, F) float32.  Weights in PyTorch layout:
       w_ih (4H, F), w_hh (4H, H), b_ih/b_hh (4H,), w_cls (C, H), b_cls (C,).
       matmul_dtype: bf16 (default; MXU-native on v5e/v6e/v7x, f32 accumulation and f32
       gate/state math) or float32 (exact)."""
    T, B, F = x.shape
    H = w_ih.shape[0] // 4
    C = w_cls.shape[0]

    mm = matmul_dtype
    f32 = jnp.float32
    store_dtype = mm          # gates_x / h_all stored in mm -> halves HBM traffic on bf16 path

    Hp = _round_up(H, 8)      # per-gate padding -> sublane-aligned gate slices
    Cp = _round_up(C, 8)
    Bp = _round_up(B, 8)
    t_blk = max(1, min(t_blk, T))
    T_pad = _round_up(T, t_blk)

    # Batch block for splitting the serial recurrence across v7x's two TensorCores;
    # only active for lane-aligned large batches (Bp >= 256), otherwise a single block.
    b_blk = 128 if (Bp % 128 == 0 and Bp >= 256) else Bp
    nb = Bp // b_blk

    # --- weight / bias repacking: pad each gate block of the 4H axis from H to Hp.
    def pad_gate_rows(w):  # (4H, X) -> (4*Hp, X), per-gate zero padding
        w4 = w.reshape(4, H, -1)
        w4 = jnp.pad(w4, ((0, 0), (0, Hp - H), (0, 0)))
        return w4.reshape(4 * Hp, -1)

    wih_p = pad_gate_rows(w_ih.astype(f32)).astype(mm)                              # (4Hp, F)
    whh_p = pad_gate_rows(jnp.pad(w_hh.astype(f32), ((0, 0), (0, Hp - H)))).astype(mm)  # (4Hp, Hp)
    bias = pad_gate_rows((b_ih + b_hh).astype(f32)[:, None]).astype(f32)            # (4Hp, 1)
    wcls_p = jnp.pad(w_cls.astype(f32), ((0, Cp - C), (0, Hp - H))).astype(mm)      # (Cp, Hp)
    bcls = jnp.pad(b_cls.astype(f32), (0, Cp - C))[:, None].astype(f32)             # (Cp, 1)

    # --- input in transposed (feature-major) layout: (T_pad, F, Bp)
    x_p = jnp.pad(x.astype(f32), ((0, T_pad - T), (0, Bp - B), (0, 0)))
    x_t = jnp.transpose(x_p, (0, 2, 1)).astype(mm)

    # ---- Phase 1 (parallel): gates_x^T = W_ih @ x^T + fused bias, per time chunk.
    gx = time_proj(x_t, wih_p, bias, t_blk=t_blk, out_dtype=store_dtype)  # (T_pad, 4Hp, Bp)

    # ---- Phase 2 (serial): recurrence.  Explicit VMEM budget (v5e 16MiB .. v7x 64MiB safe).
    gx_bytes = t_blk * 4 * Hp * b_blk * jnp.dtype(store_dtype).itemsize
    h_bytes = t_blk * Hp * b_blk * jnp.dtype(store_dtype).itemsize
    whh_bytes = 4 * Hp * Hp * jnp.dtype(mm).itemsize
    state_bytes = 2 * Hp * b_blk * 4
    vmem_need = 2 * gx_bytes + 2 * h_bytes + whh_bytes + state_bytes
    vmem_limit = int(min(max(2 * vmem_need, 16 << 20), 64 << 20))

    h_all = pl.pallas_call(
        _lstm_recurrence_kernel,
        out_shape=jax.ShapeDtypeStruct((T_pad, Hp, Bp), store_dtype),
        grid_spec=pltpu.PrefetchScalarGridSpec(
            num_scalar_prefetch=0,
            grid=(nb, T_pad // t_blk),
            in_specs=[
                pl.BlockSpec((t_blk, 4 * Hp, b_blk), lambda b, t: (t, 0, b)),
                pl.BlockSpec(memory_space=pl.ANY),    # W_hh stays in HBM; DMA'd once
            ],
            out_specs=pl.BlockSpec((t_blk, Hp, b_blk), lambda b, t: (t, 0, b)),
            scratch_shapes=[
                pltpu.VMEM((4 * Hp, Hp), mm),         # single-buffered resident W_hh
                pltpu.VMEM((Hp, b_blk), f32),         # h state (f32)
                pltpu.VMEM((Hp, b_blk), f32),         # c state (f32)
                pltpu.SemaphoreType.DMA(()),
            ],
        ),
        compiler_params=pltpu.CompilerParams(
            dimension_semantics=("parallel", "arbitrary"),  # time must run sequentially
            vmem_limit_bytes=vmem_limit,
        ),
    )(gx, whh_p)

    # ---- Phase 3 (parallel): classifier consumes h^T directly: logits^T = W_cls @ h^T + b.
    logits_t = time_proj(h_all, wcls_p, bcls, t_blk=t_blk, out_dtype=f32)  # (T_pad, Cp, Bp)

    # Tiny final relayout + un-padding in XLA (off the critical path).
    logits = jnp.transpose(logits_t[:T], (0, 2, 1))[:, :B, :C]
    return logits

    # TODO(synk): packed-sequence handling (variable lengths) not modeled; all sequences
    # are assumed full length so pack/pad is identity.


def lstm_reference(x, w_ih, w_hh, b_ih, b_hh, w_cls, b_cls):
    """Pure-JAX reference (lax.scan) mirroring torch.nn.LSTM + Linear."""
    T, B, F = x.shape
    H = w_hh.shape[1]

    def step(carry, x_t):
        h, c = carry
        gates = x_t @ w_ih.T + b_ih + h @ w_hh.T + b_hh
        i = jax.nn.sigmoid(gates[:, 0 * H:1 * H])
        f = jax.nn.sigmoid(gates[:, 1 * H:2 * H])
        g = jnp.tanh(gates[:, 2 * H:3 * H])
        o = jax.nn.sigmoid(gates[:, 3 * H:4 * H])
        c_new = f * c + i * g
        h_new = o * jnp.tanh(c_new)
        return (h_new, c_new), h_new

    h0 = jnp.zeros((B, H), jnp.float32)
    c0 = jnp.zeros((B, H), jnp.float32)
    _, hs = lax.scan(step, (h0, c0), x)            # (T, B, H)
    return hs @ w_cls.T + b_cls                    # (T, B, C)


if __name__ == "__main__":
    # Small, forward-consistent shapes.
    T, B = 8, 2            # seq, batch
    F, H, C = 16, 32, 8    # n_feature, n_hidden, n_class

    key = jax.random.PRNGKey(0)
    ks = jax.random.split(key, 8)

    scale = 1.0 / jnp.sqrt(jnp.float32(H))
    w_ih = jax.random.uniform(ks[0], (4 * H, F), jnp.float32, -scale, scale)
    w_hh = jax.random.uniform(ks[1], (4 * H, H), jnp.float32, -scale, scale)
    b_ih = jax.random.uniform(ks[2], (4 * H,), jnp.float32, -scale, scale)
    b_hh = jax.random.uniform(ks[3], (4 * H,), jnp.float32, -scale, scale)
    w_cls = jax.random.uniform(ks[4], (C, H), jnp.float32, -scale, scale)
    b_cls = jax.random.uniform(ks[5], (C,), jnp.float32, -scale, scale)

    x = jax.random.normal(ks[6], (T, B, F), jnp.float32)

    ref = lstm_reference(x, w_ih, w_hh, b_ih, b_hh, w_cls, b_cls)

    # Exact f32 path.
    out = lstm_forward(x, w_ih, w_hh, b_ih, b_hh, w_cls, b_cls,
                       matmul_dtype=jnp.float32)
    out = jax.block_until_ready(out)
    assert out.shape == (T, B, C)
    assert jnp.allclose(out, ref, atol=1e-5, rtol=1e-5), "f32 mismatch vs reference"

    # Default bf16 MXU-operand path (f32 accumulation / gate math / state).
    out_bf16 = lstm_forward(x, w_ih, w_hh, b_ih, b_hh, w_cls, b_cls)
    out_bf16 = jax.block_until_ready(out_bf16)
    assert out_bf16.shape == (T, B, C)
    assert jnp.allclose(out_bf16, ref, atol=1e-1, rtol=1e-1), "bf16 mismatch vs reference"

    print("KERNEL_OK")
</pallas_src>

<mosaic_0001>
module attributes {stable_mosaic.version = 11 : i64} {
  func.func @_time_proj_kernel(%arg0: i32, %arg1: i32, %arg2: memref<8x16x8xf32, #tpu.memory_space<vmem>>, %arg3: memref<128x16xf32, #tpu.memory_space<vmem>>, %arg4: memref<128x1xf32, #tpu.memory_space<vmem>>, %arg5: memref<8x128x8xf32, #tpu.memory_space<vmem>>) attributes {dimension_semantics = [#tpu.dimension_semantics<parallel>, #tpu.dimension_semantics<parallel>], iteration_bounds = array<i64: 1, 1>, scalar_prefetch = 0 : i64, scratch_operands = 0 : i64, tpu.core_type = #tpu.core_type<tc>, window_params = [{transform_indices = @transform_0, window_bounds = array<i64: 8, 16, 8>}, {transform_indices = @transform_1, window_bounds = array<i64: 128, 16>}, {transform_indices = @transform_2, window_bounds = array<i64: 128, 1>}, {transform_indices = @transform_3, window_bounds = array<i64: 8, 128, 8>}]} {
    %c0_i32 = arith.constant 0 : i32
    %c0 = arith.constant 0 : index
    %c0_0 = arith.constant 0 : index
    %0 = vector.load %arg3[%c0, %c0_0] : memref<128x16xf32, #tpu.memory_space<vmem>>, vector<128x16xf32>
    %1 = arith.index_cast %c0_i32 : i32 to index
    %c0_1 = arith.constant 0 : index
    %c0_2 = arith.constant 0 : index
    %2 = vector.load %arg2[%1, %c0_1, %c0_2] : memref<8x16x8xf32, #tpu.memory_space<vmem>>, vector<1x16x8xf32>
    %3 = vector.shape_cast %2 : vector<1x16x8xf32> to vector<16x8xf32>
    %cst = arith.constant dense<0.000000e+00> : vector<128x8xf32>
    %4 = tpu.matmul %0, %3, %cst {dimension_numbers = #tpu.dot_dimension_numbers<[1], [0], [0], [1], [0, 0, 1, 1], [], []>} : vector<128x16xf32>, vector<16x8xf32>, vector<128x8xf32> -> vector<128x8xf32>
    %c0_3 = arith.constant 0 : index
    %c0_4 = arith.constant 0 : index
    %5 = vector.load %arg4[%c0_3, %c0_4] : memref<128x1xf32, #tpu.memory_space<vmem>>, vector<128x1xf32>
    %6 = vector.broadcast %5 : vector<128x1xf32> to vector<128x8xf32>
    %7 = arith.addf %4, %6 : vector<128x8xf32>
    %8 = arith.index_cast %c0_i32 : i32 to index
    %c0_5 = arith.constant 0 : index
    %c0_6 = arith.constant 0 : index
    %9 = vector.load %arg5[%8, %c0_5, %c0_6] : memref<8x128x8xf32, #tpu.memory_space<vmem>>, vector<1x128x8xf32>
    %10 = vector.shape_cast %9 : vector<1x128x8xf32> to vector<128x8xf32>
    %11 = vector.shape_cast %7 : vector<128x8xf32> to vector<1x128x8xf32>
    tpu.vector_store %arg5[%8, %c0_5, %c0_6], %11 {strides = array<i32>} : memref<8x128x8xf32, #tpu.memory_space<vmem>>, vector<1x128x8xf32>,
    %c1_i32 = arith.constant 1 : i32
    %c0_7 = arith.constant 0 : index
    %c0_8 = arith.constant 0 : index
    %12 = vector.load %arg3[%c0_7, %c0_8] : memref<128x16xf32, #tpu.memory_space<vmem>>, vector<128x16xf32>
    %13 = arith.index_cast %c1_i32 : i32 to index
    %c0_9 = arith.constant 0 : index
    %c0_10 = arith.constant 0 : index
    %14 = vector.load %arg2[%13, %c0_9, %c0_10] : memref<8x16x8xf32, #tpu.memory_space<vmem>>, vector<1x16x8xf32>
    %15 = vector.shape_cast %14 : vector<1x16x8xf32> to vector<16x8xf32>
    %cst_11 = arith.constant dense<0.000000e+00> : vector<128x8xf32>
    %16 = tpu.matmul %12, %15, %cst_11 {dimension_numbers = #tpu.dot_dimension_numbers<[1], [0], [0], [1], [0, 0, 1, 1], [], []>} : vector<128x16xf32>, vector<16x8xf32>, vector<128x8xf32> -> vector<128x8xf32>
    %c0_12 = arith.constant 0 : index
    %c0_13 = arith.constant 0 : index
    %17 = vector.load %arg4[%c0_12, %c0_13] : memref<128x1xf32, #tpu.memory_space<vmem>>, vector<128x1xf32>
    %18 = vector.broadcast %17 : vector<128x1xf32> to vector<128x8xf32>
    %19 = arith.addf %16, %18 : vector<128x8xf32>
    %20 = arith.index_cast %c1_i32 : i32 to index
    %c0_14 = arith.constant 0 : index
    %c0_15 = arith.constant 0 : index
    %21 = vector.load %arg5[%20, %c0_14, %c0_15] : memref<8x128x8xf32, #tpu.memory_space<vmem>>, vector<1x128x8xf32>
    %22 = vector.shape_cast %21 : vector<1x128x8xf32> to vector<128x8xf32>
    %23 = vector.shape_cast %19 : vector<128x8xf32> to vector<1x128x8xf32>
    tpu.vector_store %arg5[%20, %c0_14, %c0_15], %23 {strides = array<i32>} : memref<8x128x8xf32, #tpu.memory_space<vmem>>, vector<1x128x8xf32>,
    %c2_i32 = arith.constant 2 : i32
    %c0_16 = arith.constant 0 : index
    %c0_17 = arith.constant 0 : index
    %24 = vector.load %arg3[%c0_16, %c0_17] : memref<128x16xf32, #tpu.memory_space<vmem>>, vector<128x16xf32>
    %25 = arith.index_cast %c2_i32 : i32 to index
    %c0_18 = arith.constant 0 : index
    %c0_19 = arith.constant 0 : index
    %26 = vector.load %arg2[%25, %c0_18, %c0_19] : memref<8x16x8xf32, #tpu.memory_space<vmem>>, vector<1x16x8xf32>
    %27 = vector.shape_cast %26 : vector<1x16x8xf32> to vector<16x8xf32>
    %cst_20 = arith.constant dense<0.000000e+00> : vector<128x8xf32>
    %28 = tpu.matmul %24, %27, %cst_20 {dimension_numbers = #tpu.dot_dimension_numbers<[1], [0], [0], [1], [0, 0, 1, 1], [], []>} : vector<128x16xf32>, vector<16x8xf32>, vector<128x8xf32> -> vector<128x8xf32>
    %c0_21 = arith.constant 0 : index
    %c0_22 = arith.constant 0 : index
    %29 = vector.load %arg4[%c0_21, %c0_22] : memref<128x1xf32, #tpu.memory_space<vmem>>, vector<128x1xf32>
    %30 = vector.broadcast %29 : vector<128x1xf32> to vector<128x8xf32>
    %31 = arith.addf %28, %30 : vector<128x8xf32>
    %32 = arith.index_cast %c2_i32 : i32 to index
    %c0_23 = arith.constant 0 : index
    %c0_24 = arith.constant 0 : index
    %33 = vector.load %arg5[%32, %c0_23, %c0_24] : memref<8x128x8xf32, #tpu.memory_space<vmem>>, vector<1x128x8xf32>
    %34 = vector.shape_cast %33 : vector<1x128x8xf32> to vector<128x8xf32>
    %35 = vector.shape_cast %31 : vector<128x8xf32> to vector<1x128x8xf32>
    tpu.vector_store %arg5[%32, %c0_23, %c0_24], %35 {strides = array<i32>} : memref<8x128x8xf32, #tpu.memory_space<vmem>>, vector<1x128x8xf32>,
    %c3_i32 = arith.constant 3 : i32
    %c0_25 = arith.constant 0 : index
    %c0_26 = arith.constant 0 : index
    %36 = vector.load %arg3[%c0_25, %c0_26] : memref<128x16xf32, #tpu.memory_space<vmem>>, vector<128x16xf32>
    %37 = arith.index_cast %c3_i32 : i32 to index
    %c0_27 = arith.constant 0 : index
    %c0_28 = arith.constant 0 : index
    %38 = vector.load %arg2[%37, %c0_27, %c0_28] : memref<8x16x8xf32, #tpu.memory_space<vmem>>, vector<1x16x8xf32>
    %39 = vector.shape_cast %38 : vector<1x16x8xf32> to vector<16x8xf32>
    %cst_29 = arith.constant dense<0.000000e+00> : vector<128x8xf32>
    %40 = tpu.matmul %36, %39, %cst_29 {dimension_numbers = #tpu.dot_dimension_numbers<[1], [0], [0], [1], [0, 0, 1, 1], [], []>} : vector<128x16xf32>, vector<16x8xf32>, vector<128x8xf32> -> vector<128x8xf32>
    %c0_30 = arith.constant 0 : index
    %c0_31 = arith.constant 0 : index
    %41 = vector.load %arg4[%c0_30, %c0_31] : memref<128x1xf32, #tpu.memory_space<vmem>>, vector<128x1xf32>
    %42 = vector.broadcast %41 : vector<128x1xf32> to vector<128x8xf32>
    %43 = arith.addf %40, %42 : vector<128x8xf32>
    %44 = arith.index_cast %c3_i32 : i32 to index
    %c0_32 = arith.constant 0 : index
    %c0_33 = arith.constant 0 : index
    %45 = vector.load %arg5[%44, %c0_32, %c0_33] : memref<8x128x8xf32, #tpu.memory_space<vmem>>, vector<1x128x8xf32>
    %46 = vector.shape_cast %45 : vector<1x128x8xf32> to vector<128x8xf32>
    %47 = vector.shape_cast %43 : vector<128x8xf32> to vector<1x128x8xf32>
    tpu.vector_store %arg5[%44, %c0_32, %c0_33], %47 {strides = array<i32>} : memref<8x128x8xf32, #tpu.memory_space<vmem>>, vector<1x128x8xf32>,
    %c4_i32 = arith.constant 4 : i32
    %c0_34 = arith.constant 0 : index
    %c0_35 = arith.constant 0 : index
    %48 = vector.load %arg3[%c0_34, %c0_35] : memref<128x16xf32, #tpu.memory_space<vmem>>, vector<128x16xf32>
    %49 = arith.index_cast %c4_i32 : i32 to index
    %c0_36 = arith.constant 0 : index
    %c0_37 = arith.constant 0 : index
    %50 = vector.load %arg2[%49, %c0_36, %c0_37] : memref<8x16x8xf32, #tpu.memory_space<vmem>>, vector<1x16x8xf32>
    %51 = vector.shape_cast %50 : vector<1x16x8xf32> to vector<16x8xf32>
    %cst_38 = arith.constant dense<0.000000e+00> : vector<128x8xf32>
    %52 = tpu.matmul %48, %51, %cst_38 {dimension_numbers = #tpu.dot_dimension_numbers<[1], [0], [0], [1], [0, 0, 1, 1], [], []>} : vector<128x16xf32>, vector<16x8xf32>, vector<128x8xf32> -> vector<128x8xf32>
    %c0_39 = arith.constant 0 : index
    %c0_40 = arith.constant 0 : index
    %53 = vector.load %arg4[%c0_39, %c0_40] : memref<128x1xf32, #tpu.memory_space<vmem>>, vector<128x1xf32>
    %54 = vector.broadcast %53 : vector<128x1xf32> to vector<128x8xf32>
    %55 = arith.addf %52, %54 : vector<128x8xf32>
    %56 = arith.index_cast %c4_i32 : i32 to index
    %c0_41 = arith.constant 0 : index
    %c0_42 = arith.constant 0 : index
    %57 = vector.load %arg5[%56, %c0_41, %c0_42] : memref<8x128x8xf32, #tpu.memory_space<vmem>>, vector<1x128x8xf32>
    %58 = vector.shape_cast %57 : vector<1x128x8xf32> to vector<128x8xf32>
    %59 = vector.shape_cast %55 : vector<128x8xf32> to vector<1x128x8xf32>
    tpu.vector_store %arg5[%56, %c0_41, %c0_42], %59 {strides = array<i32>} : memref<8x128x8xf32, #tpu.memory_space<vmem>>, vector<1x128x8xf32>,
    %c5_i32 = arith.constant 5 : i32
    %c0_43 = arith.constant 0 : index
    %c0_44 = arith.constant 0 : index
    %60 = vector.load %arg3[%c0_43, %c0_44] : memref<128x16xf32, #tpu.memory_space<vmem>>, vector<128x16xf32>
    %61 = arith.index_cast %c5_i32 : i32 to index
    %c0_45 = arith.constant 0 : index
    %c0_46 = arith.constant 0 : index
    %62 = vector.load %arg2[%61, %c0_45, %c0_46] : memref<8x16x8xf32, #tpu.memory_space<vmem>>, vector<1x16x8xf32>
    %63 = vector.shape_cast %62 : vector<1x16x8xf32> to vector<16x8xf32>
    %cst_47 = arith.constant dense<0.000000e+00> : vector<128x8xf32>
    %64 = tpu.matmul %60, %63, %cst_47 {dimension_numbers = #tpu.dot_dimension_numbers<[1], [0], [0], [1], [0, 0, 1, 1], [], []>} : vector<128x16xf32>, vector<16x8xf32>, vector<128x8xf32> -> vector<128x8xf32>
    %c0_48 = arith.constant 0 : index
    %c0_49 = arith.constant 0 : index
    %65 = vector.load %arg4[%c0_48, %c0_49] : memref<128x1xf32, #tpu.memory_space<vmem>>, vector<128x1xf32>
    %66 = vector.broadcast %65 : vector<128x1xf32> to vector<128x8xf32>
    %67 = arith.addf %64, %66 : vector<128x8xf32>
    %68 = arith.index_cast %c5_i32 : i32 to index
    %c0_50 = arith.constant 0 : index
    %c0_51 = arith.constant 0 : index
    %69 = vector.load %arg5[%68, %c0_50, %c0_51] : memref<8x128x8xf32, #tpu.memory_space<vmem>>, vector<1x128x8xf32>
    %70 = vector.shape_cast %69 : vector<1x128x8xf32> to vector<128x8xf32>
    %71 = vector.shape_cast %67 : vector<128x8xf32> to vector<1x128x8xf32>
    tpu.vector_store %arg5[%68, %c0_50, %c0_51], %71 {strides = array<i32>} : memref<8x128x8xf32, #tpu.memory_space<vmem>>, vector<1x128x8xf32>,
    %c6_i32 = arith.constant 6 : i32
    %c0_52 = arith.constant 0 : index
    %c0_53 = arith.constant 0 : index
    %72 = vector.load %arg3[%c0_52, %c0_53] : memref<128x16xf32, #tpu.memory_space<vmem>>, vector<128x16xf32>
    %73 = arith.index_cast %c6_i32 : i32 to index
    %c0_54 = arith.constant 0 : index
    %c0_55 = arith.constant 0 : index
    %74 = vector.load %arg2[%73, %c0_54, %c0_55] : memref<8x16x8xf32, #tpu.memory_space<vmem>>, vector<1x16x8xf32>
    %75 = vector.shape_cast %74 : vector<1x16x8xf32> to vector<16x8xf32>
    %cst_56 = arith.constant dense<0.000000e+00> : vector<128x8xf32>
    %76 = tpu.matmul %72, %75, %cst_56 {dimension_numbers = #tpu.dot_dimension_numbers<[1], [0], [0], [1], [0, 0, 1, 1], [], []>} : vector<128x16xf32>, vector<16x8xf32>, vector<128x8xf32> -> vector<128x8xf32>
    %c0_57 = arith.constant 0 : index
    %c0_58 = arith.constant 0 : index
    %77 = vector.load %arg4[%c0_57, %c0_58] : memref<128x1xf32, #tpu.memory_space<vmem>>, vector<128x1xf32>
    %78 = vector.broadcast %77 : vector<128x1xf32> to vector<128x8xf32>
    %79 = arith.addf %76, %78 : vector<128x8xf32>
    %80 = arith.index_cast %c6_i32 : i32 to index
    %c0_59 = arith.constant 0 : index
    %c0_60 = arith.constant 0 : index
    %81 = vector.load %arg5[%80, %c0_59, %c0_60] : memref<8x128x8xf32, #tpu.memory_space<vmem>>, vector<1x128x8xf32>
    %82 = vector.shape_cast %81 : vector<1x128x8xf32> to vector<128x8xf32>
    %83 = vector.shape_cast %79 : vector<128x8xf32> to vector<1x128x8xf32>
    tpu.vector_store %arg5[%80, %c0_59, %c0_60], %83 {strides = array<i32>} : memref<8x128x8xf32, #tpu.memory_space<vmem>>, vector<1x128x8xf32>,
    %c7_i32 = arith.constant 7 : i32
    %c0_61 = arith.constant 0 : index
    %c0_62 = arith.constant 0 : index
    %84 = vector.load %arg3[%c0_61, %c0_62] : memref<128x16xf32, #tpu.memory_space<vmem>>, vector<128x16xf32>
    %85 = arith.index_cast %c7_i32 : i32 to index
    %c0_63 = arith.constant 0 : index
    %c0_64 = arith.constant 0 : index
    %86 = vector.load %arg2[%85, %c0_63, %c0_64] : memref<8x16x8xf32, #tpu.memory_space<vmem>>, vector<1x16x8xf32>
    %87 = vector.shape_cast %86 : vector<1x16x8xf32> to vector<16x8xf32>
    %cst_65 = arith.constant dense<0.000000e+00> : vector<128x8xf32>
    %88 = tpu.matmul %84, %87, %cst_65 {dimension_numbers = #tpu.dot_dimension_numbers<[1], [0], [0], [1], [0, 0, 1, 1], [], []>} : vector<128x16xf32>, vector<16x8xf32>, vector<128x8xf32> -> vector<128x8xf32>
    %c0_66 = arith.constant 0 : index
    %c0_67 = arith.constant 0 : index
    %89 = vector.load %arg4[%c0_66, %c0_67] : memref<128x1xf32, #tpu.memory_space<vmem>>, vector<128x1xf32>
    %90 = vector.broadcast %89 : vector<128x1xf32> to vector<128x8xf32>
    %91 = arith.addf %88, %90 : vector<128x8xf32>
    %92 = arith.index_cast %c7_i32 : i32 to index
    %c0_68 = arith.constant 0 : index
    %c0_69 = arith.constant 0 : index
    %93 = vector.load %arg5[%92, %c0_68, %c0_69] : memref<8x128x8xf32, #tpu.memory_space<vmem>>, vector<1x128x8xf32>
    %94 = vector.shape_cast %93 : vector<1x128x8xf32> to vector<128x8xf32>
    %95 = vector.shape_cast %91 : vector<128x8xf32> to vector<1x128x8xf32>
    tpu.vector_store %arg5[%92, %c0_68, %c0_69], %95 {strides = array<i32>} : memref<8x128x8xf32, #tpu.memory_space<vmem>>, vector<1x128x8xf32>,
    %c8_i32 = arith.constant 8 : i32
    return
  }
  func.func @transform_0(%arg0: i32, %arg1: i32) -> (i32, i32, i32) {
    %c0_i32 = arith.constant 0 : i32
    %c0_i32_0 = arith.constant 0 : i32
    %c0_i32_1 = arith.constant 0 : i32
    return %arg0, %c0_i32, %c0_i32_0 : i32, i32, i32
  }
  func.func @transform_1(%arg0: i32, %arg1: i32) -> (i32, i32) {
    %c0_i32 = arith.constant 0 : i32
    %c0_i32_0 = arith.constant 0 : i32
    return %arg1, %c0_i32 : i32, i32
  }
  func.func @transform_2(%arg0: i32, %arg1: i32) -> (i32, i32) {
    %c0_i32 = arith.constant 0 : i32
    %c0_i32_0 = arith.constant 0 : i32
    return %arg1, %c0_i32 : i32, i32
  }
  func.func @transform_3(%arg0: i32, %arg1: i32) -> (i32, i32, i32) {
    %c0_i32 = arith.constant 0 : i32
    %c0_i32_0 = arith.constant 0 : i32
    return %arg0, %arg1, %c0_i32 : i32, i32, i32
  }
}

</mosaic_0001>

<llo_original>
// kernel: tpu_custom_call.1
$region0: #{tpu_custom_call.1}
  #allocation0 [shape = 'u32[]', space=smem, size = 0x4, offset = 0x4, fixed_abs, tag = 'smem constant byte address 0x4 - core index']
  #allocation1 [shape = 'u32[144,128]{1,0:T(1,128)}', space=vmem, size = 0x12000, scoped, tag = 'internal scratch']
  %s0 = inlined_call_operand.vmem [shape: f32[8,16,8], index: 0, kind: input, shape index: {}]
  %s1 = inlined_call_operand.vmem [shape: f32[128,16], index: 1, kind: input, shape index: {}]
  %s2 = inlined_call_operand.vmem [shape: f32[128,1], index: 2, kind: input, shape index: {}]
  %s3 = inlined_call_operand.vmem [shape: f32[8,128,8], index: 3, kind: output, shape index: {}]
  %s4 = sld [smem:[#allocation0]]
  $region22: #{tpu_custom_call.1} parent=0
    _
  %s6 = ssub.s32 1, %s4
  %s7 = scalar_select 0, %s6, %s4
  // Predicated region
  $region2: #{tpu_custom_call.1} parent=0 // pred_check
    _
  $region3: #{tpu_custom_call.1} parent=0 // pred_check_branch
    %9 = sbr.rel (0) target = $region5
  $region4: #{tpu_custom_call.1} parent=0 // pred_region
    _
  $region5: #{tpu_custom_call.1} parent=0 // pred_fallthru
    _
  // Predicated region
  $region6: #{tpu_custom_call.1} parent=0 // pred_check
    _
  $region7: #{tpu_custom_call.1} parent=0 // pred_check_branch
    %11 = sbr.rel (0) target = $region9
  $region8: #{tpu_custom_call.1} parent=0 // pred_region
    _
  $region9: #{tpu_custom_call.1} parent=0 // pred_fallthru
    _
  // Predicated region
  $region10: #{tpu_custom_call.1} parent=0 // pred_check
    _
  $region11: #{tpu_custom_call.1} parent=0 // pred_check_branch
    %13 = sbr.rel (0) target = $region13
  $region12: #{tpu_custom_call.1} parent=0 // pred_region
    _
  $region13: #{tpu_custom_call.1} parent=0 // pred_fallthru
    _
  %v14 = vld [vmem:[%s1] sm:$0xff]
  %v15 = vld [vmem:[%s1 + $0x8] sm:$0xff]
  %v16 = vld [vmem:[%s1 + $0x10] sm:$0xff]
  %v17 = vld [vmem:[%s1 + $0x18] sm:$0xff]
  %v18 = vld [vmem:[%s1 + $0x20] sm:$0xff]
  %v19 = vld [vmem:[%s1 + $0x28] sm:$0xff]
  %v20 = vld [vmem:[%s1 + $0x30] sm:$0xff]
  %v21 = vld [vmem:[%s1 + $0x38] sm:$0xff]
  %v22 = vld [vmem:[%s1 + $0x40] sm:$0xff]
  %v23 = vld [vmem:[%s1 + $0x48] sm:$0xff]
  %v24 = vld [vmem:[%s1 + $0x50] sm:$0xff]
  %v25 = vld [vmem:[%s1 + $0x58] sm:$0xff]
  %v26 = vld [vmem:[%s1 + $0x60] sm:$0xff]
  %v27 = vld [vmem:[%s1 + $0x68] sm:$0xff]
  %v28 = vld [vmem:[%s1 + $0x70] sm:$0xff]
  %v29 = vld [vmem:[%s1 + $0x78] sm:$0xff]
  %v30 = vld [vmem:[%s0] sm:$0xff]
  %v31 = vld [vmem:[%s0 + $0x8] sm:$0xff]
  %v32 = vld [vmem:[%s2] sm:$0xff]
  %v33 = vld [vmem:[%s2 + $0x8] sm:$0xff]
  %v34 = vld [vmem:[%s2 + $0x10] sm:$0xff]
  %v35 = vld [vmem:[%s2 + $0x18] sm:$0xff]
  %v36 = vld [vmem:[%s2 + $0x20] sm:$0xff]
  %v37 = vld [vmem:[%s2 + $0x28] sm:$0xff]
  %v38 = vld [vmem:[%s2 + $0x30] sm:$0xff]
  %v39 = vld [vmem:[%s2 + $0x38] sm:$0xff]
  %v40 = vld [vmem:[%s2 + $0x40] sm:$0xff]
  %v41 = vld [vmem:[%s2 + $0x48] sm:$0xff]
  %v42 = vld [vmem:[%s2 + $0x50] sm:$0xff]
  %v43 = vld [vmem:[%s2 + $0x58] sm:$0xff]
  %v44 = vld [vmem:[%s2 + $0x60] sm:$0xff]
  %v45 = vld [vmem:[%s2 + $0x68] sm:$0xff]
  %v46 = vld [vmem:[%s2 + $0x70] sm:$0xff]
  %v47 = vld [vmem:[%s2 + $0x78] sm:$0xff]
  %49 = vset.pattern.permute.xlu0 0
  %50 = vperm.xlu0 %49, %v32
  %v51 = vpop.permute.xlu0 %50
  %54 = vset.pattern.permute.xlu0 0
  %55 = vperm.xlu0 %54, %v33
  %v56 = vpop.permute.xlu0 %55
  %59 = vset.pattern.permute.xlu0 0
  %60 = vperm.xlu0 %59, %v34
  %v61 = vpop.permute.xlu0 %60
  %64 = vset.pattern.permute.xlu0 0
  %65 = vperm.xlu0 %64, %v35
  %v66 = vpop.permute.xlu0 %65
  %69 = vset.pattern.permute.xlu0 0
  %70 = vperm.xlu0 %69, %v36
  %v71 = vpop.permute.xlu0 %70
  %74 = vset.pattern.permute.xlu0 0
  %75 = vperm.xlu0 %74, %v37
  %v76 = vpop.permute.xlu0 %75
  %79 = vset.pattern.permute.xlu0 0
  %80 = vperm.xlu0 %79, %v38
  %v81 = vpop.permute.xlu0 %80
  %84 = vset.pattern.permute.xlu0 0
  %85 = vperm.xlu0 %84, %v39
  %v86 = vpop.permute.xlu0 %85
  %89 = vset.pattern.permute.xlu0 0
  %90 = vperm.xlu0 %89, %v40
  %v91 = vpop.permute.xlu0 %90
  %94 = vset.pattern.permute.xlu0 0
  %95 = vperm.xlu0 %94, %v41
  %v96 = vpop.permute.xlu0 %95
  %99 = vset.pattern.permute.xlu0 0
  %100 = vperm.xlu0 %99, %v42
  %v101 = vpop.permute.xlu0 %100
  %104 = vset.pattern.permute.xlu0 0
  %105 = vperm.xlu0 %104, %v43
  %v106 = vpop.permute.xlu0 %105
  %109 = vset.pattern.permute.xlu0 0
  %110 = vperm.xlu0 %109, %v44
  %v111 = vpop.permute.xlu0 %110
  %114 = vset.pattern.permute.xlu0 0
  %115 = vperm.xlu0 %114, %v45
  %v116 = vpop.permute.xlu0 %115
  %119 = vset.pattern.permute.xlu0 0
  %120 = vperm.xlu0 %119, %v46
  %v121 = vpop.permute.xlu0 %120
  %124 = vset.pattern.permute.xlu0 0
  %125 = vperm.xlu0 %124, %v47
  %v126 = vpop.permute.xlu0 %125
  %vm128 = vcmask 130048
  %v130 = vsel %vm128, %v14, 0
  %v133 = vsel %vm128, %v15, 0
  %v136 = vsel %vm128, %v16, 0
  %v139 = vsel %vm128, %v17, 0
  %v142 = vsel %vm128, %v18, 0
  %v145 = vsel %vm128, %v19, 0
  %v148 = vsel %vm128, %v20, 0
  %v151 = vsel %vm128, %v21, 0
  %v154 = vsel %vm128, %v22, 0
  %v157 = vsel %vm128, %v23, 0
  %v160 = vsel %vm128, %v24, 0
  %v163 = vsel %vm128, %v25, 0
  %v166 = vsel %vm128, %v26, 0
  %v169 = vsel %vm128, %v27, 0
  %v172 = vsel %vm128, %v28, 0
  %v175 = vsel %vm128, %v29, 0
  %177 = vmatprep.subr.mxu0 0.0
  %178 = vmatpush1.msra.mxu0 0.0
  %179 = vmatprep.subr.mxu0 0.0
  %180 = vmatpush1.msra.mxu0 0.0
  %181 = vmatprep.subr.mxu0 0.0
  %182 = vmatpush1.msra.mxu0 0.0
  %183 = vmatprep.subr.mxu0 0.0
  %184 = vmatpush1.msra.mxu0 0.0
  %185 = vmatprep.subr.mxu0 0.0
  %186 = vmatpush1.msra.mxu0 0.0
  %187 = vmatprep.subr.mxu0 0.0
  %188 = vmatpush1.msra.mxu0 0.0
  %189 = vmatprep.subr.mxu0 0.0
  %190 = vmatpush1.msra.mxu0 0.0
  %191 = vmatprep.subr.mxu0 0.0
  %192 = vmatpush1.msra.mxu0 0.0
  %193 = vmatprep.subr.mxu0 0.0
  %194 = vmatpush1.msra.mxu0 0.0
  %195 = vmatprep.subr.mxu0 0.0
  %196 = vmatpush1.msra.mxu0 0.0
  %197 = vmatprep.subr.mxu0 0.0
  %198 = vmatpush1.msra.mxu0 0.0
  %199 = vmatprep.subr.mxu0 0.0
  %200 = vmatpush1.msra.mxu0 0.0
  %201 = vmatprep.subr.mxu0 0.0
  %202 = vmatpush1.msra.mxu0 0.0
  %203 = vmatprep.subr.mxu0 0.0
  %204 = vmatpush1.msra.mxu0 0.0
  %205 = vmatprep.subr.mxu0 0.0
  %206 = vmatpush1.msra.mxu0 %v31
  %207 = vmatprep.subr.mxu0 0.0
  %208 = vmatpush1.msra.mxu0 %v30
  %209 = vmatprep.subr.mxu0 0.0
  %210 = vmatpush2.msra.mxu0 0.0
  %211 = vmatprep.subr.mxu0 0.0
  %212 = vmatpush2.msra.mxu0 0.0
  %213 = vmatprep.subr.mxu0 0.0
  %214 = vmatpush2.msra.mxu0 0.0
  %215 = vmatprep.subr.mxu0 0.0
  %216 = vmatpush2.msra.mxu0 0.0
  %217 = vmatprep.subr.mxu0 0.0
  %218 = vmatpush2.msra.mxu0 0.0
  %219 = vmatprep.subr.mxu0 0.0
  %220 = vmatpush2.msra.mxu0 0.0
  %221 = vmatprep.subr.mxu0 0.0
  %222 = vmatpush2.msra.mxu0 0.0
  %223 = vmatprep.subr.mxu0 0.0
  %224 = vmatpush2.msra.mxu0 0.0
  %225 = vmatprep.subr.mxu0 0.0
  %226 = vmatpush2.msra.mxu0 0.0
  %227 = vmatprep.subr.mxu0 0.0
  %228 = vmatpush2.msra.mxu0 0.0
  %229 = vmatprep.subr.mxu0 0.0
  %230 = vmatpush2.msra.mxu0 0.0
  %231 = vmatprep.subr.mxu0 0.0
  %232 = vmatpush2.msra.mxu0 0.0
  %233 = vmatprep.subr.mxu0 0.0
  %234 = vmatpush2.msra.mxu0 0.0
  %235 = vmatprep.subr.mxu0 0.0
  %236 = vmatpush2.msra.mxu0 0.0
  %237 = vmatprep.subr.mxu0 0.0
  %238 = vmatpush2.msra.mxu0 0.0
  %239 = vmatprep.subr.mxu0 0.0
  %240 = vmatpush2.msra.mxu0 0.0
  %241 = vmatprep.mubr.f32.mxu0 0.0
  %242 = vmatmul.mubr.f32.gmra.mxu0 %v130
  %v243 = vpop.f32.mrf.mxu0
  %v244 = vadd.f32 %v51, %v243
  %v245 = vpop.f32.mrf.mxu0
  %246 = vmatprep.mubr.f32.mxu0 0.0
  %247 = vmatmul.mubr.f32.gmra.mxu0 %v133
  %v248 = vpop.f32.mrf.mxu0
  %v249 = vadd.f32 %v56, %v248
  %v250 = vpop.f32.mrf.mxu0
  %251 = vmatprep.mubr.f32.mxu0 0.0
  %252 = vmatmul.mubr.f32.gmra.mxu0 %v136
  %v253 = vpop.f32.mrf.mxu0
  %v254 = vadd.f32 %v61, %v253
  %v255 = vpop.f32.mrf.mxu0
  %256 = vmatprep.mubr.f32.mxu0 0.0
  %257 = vmatmul.mubr.f32.gmra.mxu0 %v139
  %v258 = vpop.f32.mrf.mxu0
  %v259 = vadd.f32 %v66, %v258
  %v260 = vpop.f32.mrf.mxu0
  %261 = vmatprep.mubr.f32.mxu0 0.0
  %262 = vmatmul.mubr.f32.gmra.mxu0 %v142
  %v263 = vpop.f32.mrf.mxu0
  %v264 = vadd.f32 %v71, %v263
  %v265 = vpop.f32.mrf.mxu0
  %266 = vmatprep.mubr.f32.mxu0 0.0
  %267 = vmatmul.mubr.f32.gmra.mxu0 %v145
  %v268 = vpop.f32.mrf.mxu0
  %v269 = vadd.f32 %v76, %v268
  %v270 = vpop.f32.mrf.mxu0
  %271 = vmatprep.mubr.f32.mxu0 0.0
  %272 = vmatmul.mubr.f32.gmra.mxu0 %v148
  %v273 = vpop.f32.mrf.mxu0
  %v274 = vadd.f32 %v81, %v273
  %v275 = vpop.f32.mrf.mxu0
  %276 = vmatprep.mubr.f32.mxu0 0.0
  %277 = vmatmul.mubr.f32.gmra.mxu0 %v151
  %v278 = vpop.f32.mrf.mxu0
  %v279 = vadd.f32 %v86, %v278
  %v280 = vpop.f32.mrf.mxu0
  %281 = vmatprep.mubr.f32.mxu0 0.0
  %282 = vmatmul.mubr.f32.gmra.mxu0 %v154
  %v283 = vpop.f32.mrf.mxu0
  %v284 = vadd.f32 %v91, %v283
  %v285 = vpop.f32.mrf.mxu0
  %286 = vmatprep.mubr.f32.mxu0 0.0
  %287 = vmatmul.mubr.f32.gmra.mxu0 %v157
  %v288 = vpop.f32.mrf.mxu0
  %v289 = vadd.f32 %v96, %v288
  %v290 = vpop.f32.mrf.mxu0
  %291 = vmatprep.mubr.f32.mxu0 0.0
  %292 = vmatmul.mubr.f32.gmra.mxu0 %v160
  %v293 = vpop.f32.mrf.mxu0
  %v294 = vadd.f32 %v101, %v293
  %v295 = vpop.f32.mrf.mxu0
  %296 = vmatprep.mubr.f32.mxu0 0.0
  %297 = vmatmul.mubr.f32.gmra.mxu0 %v163
  %v298 = vpop.f32.mrf.mxu0
  %v299 = vadd.f32 %v106, %v298
  %v300 = vpop.f32.mrf.mxu0
  %301 = vmatprep.mubr.f32.mxu0 0.0
  %302 = vmatmul.mubr.f32.gmra.mxu0 %v166
  %v303 = vpop.f32.mrf.mxu0
  %v304 = vadd.f32 %v111, %v303
  %v305 = vpop.f32.mrf.mxu0
  %306 = vmatprep.mubr.f32.mxu0 0.0
  %307 = vmatmul.mubr.f32.gmra.mxu0 %v169
  %v308 = vpop.f32.mrf.mxu0
  %v309 = vadd.f32 %v116, %v308
  %v310 = vpop.f32.mrf.mxu0
  %311 = vmatprep.mubr.f32.mxu0 0.0
  %312 = vmatmul.mubr.f32.gmra.mxu0 %v172
  %v313 = vpop.f32.mrf.mxu0
  %v314 = vadd.f32 %v121, %v313
  %v315 = vpop.f32.mrf.mxu0
  %316 = vmatprep.mubr.f32.mxu0 0.0
  %317 = vmatmul.mubr.f32.gmra.mxu0 %v175
  %v318 = vpop.f32.mrf.mxu0
  %v319 = vadd.f32 %v126, %v318
  %v320 = vpop.f32.mrf.mxu0
  %321 = vdwg.mxu0
  %vm322 = vcmask 64512
  %323 = vst.msk [vmem:[%s3] sm:$0xff] %vm322, %v244
  %324 = vst.msk [vmem:[%s3 + $0x8] sm:$0xff] %vm322, %v249
  %325 = vst.msk [vmem:[%s3 + $0x10] sm:$0xff] %vm322, %v254
  %326 = vst.msk [vmem:[%s3 + $0x18] sm:$0xff] %vm322, %v259
  %327 = vst.msk [vmem:[%s3 + $0x20] sm:$0xff] %vm322, %v264
  %328 = vst.msk [vmem:[%s3 + $0x28] sm:$0xff] %vm322, %v269
  %329 = vst.msk [vmem:[%s3 + $0x30] sm:$0xff] %vm322, %v274
  %330 = vst.msk [vmem:[%s3 + $0x38] sm:$0xff] %vm322, %v279
  %331 = vst.msk [vmem:[%s3 + $0x40] sm:$0xff] %vm322, %v284
  %332 = vst.msk [vmem:[%s3 + $0x48] sm:$0xff] %vm322, %v289
  %333 = vst.msk [vmem:[%s3 + $0x50] sm:$0xff] %vm322, %v294
  %334 = vst.msk [vmem:[%s3 + $0x58] sm:$0xff] %vm322, %v299
  %335 = vst.msk [vmem:[%s3 + $0x60] sm:$0xff] %vm322, %v304
  %336 = vst.msk [vmem:[%s3 + $0x68] sm:$0xff] %vm322, %v309
  %337 = vst.msk [vmem:[%s3 + $0x70] sm:$0xff] %vm322, %v314
  %338 = vst.msk [vmem:[%s3 + $0x78] sm:$0xff] %vm322, %v319
  %v339 = vld [vmem:[%s1] sm:$0xff]
  %v340 = vld [vmem:[%s1 + $0x8] sm:$0xff]
  %v341 = vld [vmem:[%s1 + $0x10] sm:$0xff]
  %v342 = vld [vmem:[%s1 + $0x18] sm:$0xff]
  %v343 = vld [vmem:[%s1 + $0x20] sm:$0xff]
  %v344 = vld [vmem:[%s1 + $0x28] sm:$0xff]
  %v345 = vld [vmem:[%s1 + $0x30] sm:$0xff]
  %v346 = vld [vmem:[%s1 + $0x38] sm:$0xff]
  %v347 = vld [vmem:[%s1 + $0x40] sm:$0xff]
  %v348 = vld [vmem:[%s1 + $0x48] sm:$0xff]
  %v349 = vld [vmem:[%s1 + $0x50] sm:$0xff]
  %v350 = vld [vmem:[%s1 + $0x58] sm:$0xff]
  %v351 = vld [vmem:[%s1 + $0x60] sm:$0xff]
  %v352 = vld [vmem:[%s1 + $0x68] sm:$0xff]
  %v353 = vld [vmem:[%s1 + $0x70] sm:$0xff]
  %v354 = vld [vmem:[%s1 + $0x78] sm:$0xff]
  %s355 = scalar_lea.vmem %s0, 16
  %v356 = vld [vmem:[%s355] sm:$0xff]
  %v357 = vld [vmem:[%s355 + $0x8] sm:$0xff]
  %v358 = vld [vmem:[%s2] sm:$0xff]
  %v359 = vld [vmem:[%s2 + $0x8] sm:$0xff]
  %v360 = vld [vmem:[%s2 + $0x10] sm:$0xff]
  %v361 = vld [vmem:[%s2 + $0x18] sm:$0xff]
  %v362 = vld [vmem:[%s2 + $0x20] sm:$0xff]
  %v363 = vld [vmem:[%s2 + $0x28] sm:$0xff]
  %v364 = vld [vmem:[%s2 + $0x30] sm:$0xff]
  %v365 = vld [vmem:[%s2 + $0x38] sm:$0xff]
  %v366 = vld [vmem:[%s2 + $0x40] sm:$0xff]
  %v367 = vld [vmem:[%s2 + $0x48] sm:$0xff]
  %v368 = vld [vmem:[%s2 + $0x50] sm:$0xff]
  %v369 = vld [vmem:[%s2 + $0x58] sm:$0xff]
  %v370 = vld [vmem:[%s2 + $0x60] sm:$0xff]
  %v371 = vld [vmem:[%s2 + $0x68] sm:$0xff]
  %v372 = vld [vmem:[%s2 + $0x70] sm:$0xff]
  %v373 = vld [vmem:[%s2 + $0x78] sm:$0xff]
  %375 = vset.pattern.permute.xlu0 0
  %376 = vperm.xlu0 %375, %v358
  %v377 = vpop.permute.xlu0 %376
  %380 = vset.pattern.permute.xlu0 0
  %381 = vperm.xlu0 %380, %v359
  %v382 = vpop.permute.xlu0 %381
  %385 = vset.pattern.permute.xlu0 0
  %386 = vperm.xlu0 %385, %v360
  %v387 = vpop.permute.xlu0 %386
  %390 = vset.pattern.permute.xlu0 0
  %391 = vperm.xlu0 %390, %v361
  %v392 = vpop.permute.xlu0 %391
  %395 = vset.pattern.permute.xlu0 0
  %396 = vperm.xlu0 %395, %v362
  %v397 = vpop.permute.xlu0 %396
  %400 = vset.pattern.permute.xlu0 0
  %401 = vperm.xlu0 %400, %v363
  %v402 = vpop.permute.xlu0 %401
  %405 = vset.pattern.permute.xlu0 0
  %406 = vperm.xlu0 %405, %v364
  %v407 = vpop.permute.xlu0 %406
  %410 = vset.pattern.permute.xlu0 0
  %411 = vperm.xlu0 %410, %v365
  %v412 = vpop.permute.xlu0 %411
  %415 = vset.pattern.permute.xlu0 0
  %416 = vperm.xlu0 %415, %v366
  %v417 = vpop.permute.xlu0 %416
  %420 = vset.pattern.permute.xlu0 0
  %421 = vperm.xlu0 %420, %v367
  %v422 = vpop.permute.xlu0 %421
  %425 = vset.pattern.permute.xlu0 0
  %426 = vperm.xlu0 %425, %v368
  %v427 = vpop.permute.xlu0 %426
  %430 = vset.pattern.permute.xlu0 0
  %431 = vperm.xlu0 %430, %v369
  %v432 = vpop.permute.xlu0 %431
  %435 = vset.pattern.permute.xlu0 0
  %436 = vperm.xlu0 %435, %v370
  %v437 = vpop.permute.xlu0 %436
  %440 = vset.pattern.permute.xlu0 0
  %441 = vperm.xlu0 %440, %v371
  %v442 = vpop.permute.xlu0 %441
  %445 = vset.pattern.permute.xlu0 0
  %446 = vperm.xlu0 %445, %v372
  %v447 = vpop.permute.xlu0 %446
  %450 = vset.pattern.permute.xlu0 0
  %451 = vperm.xlu0 %450, %v373
  %v452 = vpop.permute.xlu0 %451
  %v455 = vsel %vm128, %v339, 0
  %v458 = vsel %vm128, %v340, 0
  %v461 = vsel %vm128, %v341, 0
  %v464 = vsel %vm128, %v342, 0
  %v467 = vsel %vm128, %v343, 0
  %v470 = vsel %vm128, %v344, 0
  %v473 = vsel %vm128, %v345, 0
  %v476 = vsel %vm128, %v346, 0
  %v479 = vsel %vm128, %v347, 0
  %v482 = vsel %vm128, %v348, 0
  %v485 = vsel %vm128, %v349, 0
  %v488 = vsel %vm128, %v350, 0
  %v491 = vsel %vm128, %v351, 0
  %v494 = vsel %vm128, %v352, 0
  %v497 = vsel %vm128, %v353, 0
  %v500 = vsel %vm128, %v354, 0
  %502 = vmatprep.subr.mxu0 0.0
  %503 = vmatpush1.msra.mxu0 0.0
  %504 = vmatprep.subr.mxu0 0.0
  %505 = vmatpush1.msra.mxu0 0.0
  %506 = vmatprep.subr.mxu0 0.0
  %507 = vmatpush1.msra.mxu0 0.0
  %508 = vmatprep.subr.mxu0 0.0
  %509 = vmatpush1.msra.mxu0 0.0
  %510 = vmatprep.subr.mxu0 0.0
  %511 = vmatpush1.msra.mxu0 0.0
  %512 = vmatprep.subr.mxu0 0.0
  %513 = vmatpush1.msra.mxu0 0.0
  %514 = vmatprep.subr.mxu0 0.0
  %515 = vmatpush1.msra.mxu0 0.0
  %516 = vmatprep.subr.mxu0 0.0
  %517 = vmatpush1.msra.mxu0 0.0
  %518 = vmatprep.subr.mxu0 0.0
  %519 = vmatpush1.msra.mxu0 0.0
  %520 = vmatprep.subr.mxu0 0.0
  %521 = vmatpush1.msra.mxu0 0.0
  %522 = vmatprep.subr.mxu0 0.0
  %523 = vmatpush1.msra.mxu0 0.0
  %524 = vmatprep.subr.mxu0 0.0
  %525 = vmatpush1.msra.mxu0 0.0
  %526 = vmatprep.subr.mxu0 0.0
  %527 = vmatpush1.msra.mxu0 0.0
  %528 = vmatprep.subr.mxu0 0.0
  %529 = vmatpush1.msra.mxu0 0.0
  %530 = vmatprep.subr.mxu0 0.0
  %531 = vmatpush1.msra.mxu0 %v357
  %532 = vmatprep.subr.mxu0 0.0
  %533 = vmatpush1.msra.mxu0 %v356
  %534 = vmatprep.subr.mxu0 0.0
  %535 = vmatpush2.msra.mxu0 0.0
  %536 = vmatprep.subr.mxu0 0.0
  %537 = vmatpush2.msra.mxu0 0.0
  %538 = vmatprep.subr.mxu0 0.0
  %539 = vmatpush2.msra.mxu0 0.0
  %540 = vmatprep.subr.mxu0 0.0
  %541 = vmatpush2.msra.mxu0 0.0
  %542 = vmatprep.subr.mxu0 0.0
  %543 = vmatpush2.msra.mxu0 0.0
  %544 = vmatprep.subr.mxu0 0.0
  %545 = vmatpush2.msra.mxu0 0.0
  %546 = vmatprep.subr.mxu0 0.0
  %547 = vmatpush2.msra.mxu0 0.0
  %548 = vmatprep.subr.mxu0 0.0
  %549 = vmatpush2.msra.mxu0 0.0
  %550 = vmatprep.subr.mxu0 0.0
  %551 = vmatpush2.msra.mxu0 0.0
  %552 = vmatprep.subr.mxu0 0.0
  %553 = vmatpush2.msra.mxu0 0.0
  %554 = vmatprep.subr.mxu0 0.0
  %555 = vmatpush2.msra.mxu0 0.0
  %556 = vmatprep.subr.mxu0 0.0
  %557 = vmatpush2.msra.mxu0 0.0
  %558 = vmatprep.subr.mxu0 0.0
  %559 = vmatpush2.msra.mxu0 0.0
  %560 = vmatprep.subr.mxu0 0.0
  %561 = vmatpush2.msra.mxu0 0.0
  %562 = vmatprep.subr.mxu0 0.0
  %563 = vmatpush2.msra.mxu0 0.0
  %564 = vmatprep.subr.mxu0 0.0
  %565 = vmatpush2.msra.mxu0 0.0
  %566 = vmatprep.mubr.f32.mxu0 0.0
  %567 = vmatmul.mubr.f32.gmra.mxu0 %v455
  %v568 = vpop.f32.mrf.mxu0
  %v569 = vadd.f32 %v377, %v568
  %v570 = vpop.f32.mrf.mxu0
  %571 = vmatprep.mubr.f32.mxu0 0.0
  %572 = vmatmul.mubr.f32.gmra.mxu0 %v458
  %v573 = vpop.f32.mrf.mxu0
  %v574 = vadd.f32 %v382, %v573
  %v575 = vpop.f32.mrf.mxu0
  %576 = vmatprep.mubr.f32.mxu0 0.0
  %577 = vmatmul.mubr.f32.gmra.mxu0 %v461
  %v578 = vpop.f32.mrf.mxu0
  %v579 = vadd.f32 %v387, %v578
  %v580 = vpop.f32.mrf.mxu0
  %581 = vmatprep.mubr.f32.mxu0 0.0
  %582 = vmatmul.mubr.f32.gmra.mxu0 %v464
  %v583 = vpop.f32.mrf.mxu0
  %v584 = vadd.f32 %v392, %v583
  %v585 = vpop.f32.mrf.mxu0
  %586 = vmatprep.mubr.f32.mxu0 0.0
  %587 = vmatmul.mubr.f32.gmra.mxu0 %v467
  %v588 = vpop.f32.mrf.mxu0
  %v589 = vadd.f32 %v397, %v588
  %v590 = vpop.f32.mrf.mxu0
  %591 = vmatprep.mubr.f32.mxu0 0.0
  %592 = vmatmul.mubr.f32.gmra.mxu0 %v470
  %v593 = vpop.f32.mrf.mxu0
  %v594 = vadd.f32 %v402, %v593
  %v595 = vpop.f32.mrf.mxu0
  %596 = vmatprep.mubr.f32.mxu0 0.0
  %597 = vmatmul.mubr.f32.gmra.mxu0 %v473
  %v598 = vpop.f32.mrf.mxu0
  %v599 = vadd.f32 %v407, %v598
  %v600 = vpop.f32.mrf.mxu0
  %601 = vmatprep.mubr.f32.mxu0 0.0
  %602 = vmatmul.mubr.f32.gmra.mxu0 %v476
  %v603 = vpop.f32.mrf.mxu0
  %v604 = vadd.f32 %v412, %v603
  %v605 = vpop.f32.mrf.mxu0
  %606 = vmatprep.mubr.f32.mxu0 0.0
  %607 = vmatmul.mubr.f32.gmra.mxu0 %v479
  %v608 = vpop.f32.mrf.mxu0
  %v609 = vadd.f32 %v417, %v608
  %v610 = vpop.f32.mrf.mxu0
  %611 = vmatprep.mubr.f32.mxu0 0.0
  %612 = vmatmul.mubr.f32.gmra.mxu0 %v482
  %v613 = vpop.f32.mrf.mxu0
  %v614 = vadd.f32 %v422, %v613
  %v615 = vpop.f32.mrf.mxu0
  %616 = vmatprep.mubr.f32.mxu0 0.0
  %617 = vmatmul.mubr.f32.gmra.mxu0 %v485
  %v618 = vpop.f32.mrf.mxu0
  %v619 = vadd.f32 %v427, %v618
  %v620 = vpop.f32.mrf.mxu0
  %621 = vmatprep.mubr.f32.mxu0 0.0
  %622 = vmatmul.mubr.f32.gmra.mxu0 %v488
  %v623 = vpop.f32.mrf.mxu0
  %v624 = vadd.f32 %v432, %v623
  %v625 = vpop.f32.mrf.mxu0
  %626 = vmatprep.mubr.f32.mxu0 0.0
  %627 = vmatmul.mubr.f32.gmra.mxu0 %v491
  %v628 = vpop.f32.mrf.mxu0
  %v629 = vadd.f32 %v437, %v628
  %v630 = vpop.f32.mrf.mxu0
  %631 = vmatprep.mubr.f32.mxu0 0.0
  %632 = vmatmul.mubr.f32.gmra.mxu0 %v494
  %v633 = vpop.f32.mrf.mxu0
  %v634 = vadd.f32 %v442, %v633
  %v635 = vpop.f32.mrf.mxu0
  %636 = vmatprep.mubr.f32.mxu0 0.0
  %637 = vmatmul.mubr.f32.gmra.mxu0 %v497
  %v638 = vpop.f32.mrf.mxu0
  %v639 = vadd.f32 %v447, %v638
  %v640 = vpop.f32.mrf.mxu0
  %641 = vmatprep.mubr.f32.mxu0 0.0
  %642 = vmatmul.mubr.f32.gmra.mxu0 %v500
  %v643 = vpop.f32.mrf.mxu0
  %v644 = vadd.f32 %v452, %v643
  %v645 = vpop.f32.mrf.mxu0
  %646 = vdwg.mxu0
  %s647 = scalar_lea.vmem %s3, 128
  %648 = vst.msk [vmem:[%s647] sm:$0xff] %vm322, %v569
  %649 = vst.msk [vmem:[%s647 + $0x8] sm:$0xff] %vm322, %v574
  %650 = vst.msk [vmem:[%s647 + $0x10] sm:$0xff] %vm322, %v579
  %651 = vst.msk [vmem:[%s647 + $0x18] sm:$0xff] %vm322, %v584
  %652 = vst.msk [vmem:[%s647 + $0x20] sm:$0xff] %vm322, %v589
  %653 = vst.msk [vmem:[%s647 + $0x28] sm:$0xff] %vm322, %v594
  %654 = vst.msk [vmem:[%s647 + $0x30] sm:$0xff] %vm322, %v599
  %655 = vst.msk [vmem:[%s647 + $0x38] sm:$0xff] %vm322, %v604
  %656 = vst.msk [vmem:[%s647 + $0x40] sm:$0xff] %vm322, %v609
  %657 = vst.msk [vmem:[%s647 + $0x48] sm:$0xff] %vm322, %v614
  %658 = vst.msk [vmem:[%s647 + $0x50] sm:$0xff] %vm322, %v619
  %659 = vst.msk [vmem:[%s647 + $0x58] sm:$0xff] %vm322, %v624
  %660 = vst.msk [vmem:[%s647 + $0x60] sm:$0xff] %vm322, %v629
  %661 = vst.msk [vmem:[%s647 + $0x68] sm:$0xff] %vm322, %v634
  %662 = vst.msk [vmem:[%s647 + $0x70] sm:$0xff] %vm322, %v639
  %663 = vst.msk [vmem:[%s647 + $0x78] sm:$0xff] %vm322, %v644
  %v664 = vld [vmem:[%s1] sm:$0xff]
  %v665 = vld [vmem:[%s1 + $0x8] sm:$0xff]
  %v666 = vld [vmem:[%s1 + $0x10] sm:$0xff]
  %v667 = vld [vmem:[%s1 + $0x18] sm:$0xff]
  %v668 = vld [vmem:[%s1 + $0x20] sm:$0xff]
  %v669 = vld [vmem:[%s1 + $0x28] sm:$0xff]
  %v670 = vld [vmem:[%s1 + $0x30] sm:$0xff]
  %v671 = vld [vmem:[%s1 + $0x38] sm:$0xff]
  %v672 = vld [vmem:[%s1 + $0x40] sm:$0xff]
  %v673 = vld [vmem:[%s1 + $0x48] sm:$0xff]
  %v674 = vld [vmem:[%s1 + $0x50] sm:$0xff]
  %v675 = vld [vmem:[%s1 + $0x58] sm:$0xff]
  %v676 = vld [vmem:[%s1 + $0x60] sm:$0xff]
  %v677 = vld [vmem:[%s1 + $0x68] sm:$0xff]
  %v678 = vld [vmem:[%s1 + $0x70] sm:$0xff]
  %v679 = vld [vmem:[%s1 + $0x78] sm:$0xff]
  %s680 = scalar_lea.vmem %s0, 32
  %v681 = vld [vmem:[%s680] sm:$0xff]
  %v682 = vld [vmem:[%s680 + $0x8] sm:$0xff]
  %v683 = vld [vmem:[%s2] sm:$0xff]
  %v684 = vld [vmem:[%s2 + $0x8] sm:$0xff]
  %v685 = vld [vmem:[%s2 + $0x10] sm:$0xff]
  %v686 = vld [vmem:[%s2 + $0x18] sm:$0xff]
  %v687 = vld [vmem:[%s2 + $0x20] sm:$0xff]
  %v688 = vld [vmem:[%s2 + $0x28] sm:$0xff]
  %v689 = vld [vmem:[%s2 + $0x30] sm:$0xff]
  %v690 = vld [vmem:[%s2 + $0x38] sm:$0xff]
  %v691 = vld [vmem:[%s2 + $0x40] sm:$0xff]
  %v692 = vld [vmem:[%s2 + $0x48] sm:$0xff]
  %v693 = vld [vmem:[%s2 + $0x50] sm:$0xff]
  %v694 = vld [vmem:[%s2 + $0x58] sm:$0xff]
  %v695 = vld [vmem:[%s2 + $0x60] sm:$0xff]
  %v696 = vld [vmem:[%s2 + $0x68] sm:$0xff]
  %v697 = vld [vmem:[%s2 + $0x70] sm:$0xff]
  %v698 = vld [vmem:[%s2 + $0x78] sm:$0xff]
  %700 = vset.pattern.permute.xlu0 0
  %701 = vperm.xlu0 %700, %v683
  %v702 = vpop.permute.xlu0 %701
  %705 = vset.pattern.permute.xlu0 0
  %706 = vperm.xlu0 %705, %v684
  %v707 = vpop.permute.xlu0 %706
  %710 = vset.pattern.permute.xlu0 0
  %711 = vperm.xlu0 %710, %v685
  %v712 = vpop.permute.xlu0 %711
  %715 = vset.pattern.permute.xlu0 0
  %716 = vperm.xlu0 %715, %v686
  %v717 = vpop.permute.xlu0 %716
  %720 = vset.pattern.permute.xlu0 0
  %721 = vperm.xlu0 %720, %v687
  %v722 = vpop.permute.xlu0 %721
  %725 = vset.pattern.permute.xlu0 0
  %726 = vperm.xlu0 %725, %v688
  %v727 = vpop.permute.xlu0 %726
  %730 = vset.pattern.permute.xlu0 0
  %731 = vperm.xlu0 %730, %v689
  %v732 = vpop.permute.xlu0 %731
  %735 = vset.pattern.permute.xlu0 0
  %736 = vperm.xlu0 %735, %v690
  %v737 = vpop.permute.xlu0 %736
  %740 = vset.pattern.permute.xlu0 0
  %741 = vperm.xlu0 %740, %v691
  %v742 = vpop.permute.xlu0 %741
  %745 = vset.pattern.permute.xlu0 0
  %746 = vperm.xlu0 %745, %v692
  %v747 = vpop.permute.xlu0 %746
  %750 = vset.pattern.permute.xlu0 0
  %751 = vperm.xlu0 %750, %v693
  %v752 = vpop.permute.xlu0 %751
  %755 = vset.pattern.permute.xlu0 0
  %756 = vperm.xlu0 %755, %v694
  %v757 = vpop.permute.xlu0 %756
  %760 = vset.pattern.permute.xlu0 0
  %761 = vperm.xlu0 %760, %v695
  %v762 = vpop.permute.xlu0 %761
  %765 = vset.pattern.permute.xlu0 0
  %766 = vperm.xlu0 %765, %v696
  %v767 = vpop.permute.xlu0 %766
  %770 = vset.pattern.permute.xlu0 0
  %771 = vperm.xlu0 %770, %v697
  %v772 = vpop.permute.xlu0 %771
  %775 = vset.pattern.permute.xlu0 0
  %776 = vperm.xlu0 %775, %v698
  %v777 = vpop.permute.xlu0 %776
  %v780 = vsel %vm128, %v664, 0
  %v783 = vsel %vm128, %v665, 0
  %v786 = vsel %vm128, %v666, 0
  %v789 = vsel %vm128, %v667, 0
  %v792 = vsel %vm128, %v668, 0
  %v795 = vsel %vm128, %v669, 0
  %v798 = vsel %vm128, %v670, 0
  %v801 = vsel %vm128, %v671, 0
  %v804 = vsel %vm128, %v672, 0
  %v807 = vsel %vm128, %v673, 0
  %v810 = vsel %vm128, %v674, 0
  %v813 = vsel %vm128, %v675, 0
  %v816 = vsel %vm128, %v676, 0
  %v819 = vsel %vm128, %v677, 0
  %v822 = vsel %vm128, %v678, 0
  %v825 = vsel %vm128, %v679, 0
  %827 = vmatprep.subr.mxu0 0.0
  %828 = vmatpush1.msra.mxu0 0.0
  %829 = vmatprep.subr.mxu0 0.0
  %830 = vmatpush1.msra.mxu0 0.0
  %831 = vmatprep.subr.mxu0 0.0
  %832 = vmatpush1.msra.mxu0 0.0
  %833 = vmatprep.subr.mxu0 0.0
  %834 = vmatpush1.msra.mxu0 0.0
  %835 = vmatprep.subr.mxu0 0.0
  %836 = vmatpush1.msra.mxu0 0.0
  %837 = vmatprep.subr.mxu0 0.0
  %838 = vmatpush1.msra.mxu0 0.0
  %839 = vmatprep.subr.mxu0 0.0
  %840 = vmatpush1.msra.mxu0 0.0
  %841 = vmatprep.subr.mxu0 0.0
  %842 = vmatpush1.msra.mxu0 0.0
  %843 = vmatprep.subr.mxu0 0.0
  %844 = vmatpush1.msra.mxu0 0.0
  %845 = vmatprep.subr.mxu0 0.0
  %846 = vmatpush1.msra.mxu0 0.0
  %847 = vmatprep.subr.mxu0 0.0
  %848 = vmatpush1.msra.mxu0 0.0
  %849 = vmatprep.subr.mxu0 0.0
  %850 = vmatpush1.msra.mxu0 0.0
  %851 = vmatprep.subr.mxu0 0.0
  %852 = vmatpush1.msra.mxu0 0.0
  %853 = vmatprep.subr.mxu0 0.0
  %854 = vmatpush1.msra.mxu0 0.0
  %855 = vmatprep.subr.mxu0 0.0
  %856 = vmatpush1.msra.mxu0 %v682
  %857 = vmatprep.subr.mxu0 0.0
  %858 = vmatpush1.msra.mxu0 %v681
  %859 = vmatprep.subr.mxu0 0.0
  %860 = vmatpush2.msra.mxu0 0.0
  %861 = vmatprep.subr.mxu0 0.0
  %862 = vmatpush2.msra.mxu0 0.0
  %863 = vmatprep.subr.mxu0 0.0
  %864 = vmatpush2.msra.mxu0 0.0
  %865 = vmatprep.subr.mxu0 0.0
  %866 = vmatpush2.msra.mxu0 0.0
  %867 = vmatprep.subr.mxu0 0.0
  %868 = vmatpush2.msra.mxu0 0.0
  %869 = vmatprep.subr.mxu0 0.0
  %870 = vmatpush2.msra.mxu0 0.0
  %871 = vmatprep.subr.mxu0 0.0
  %872 = vmatpush2.msra.mxu0 0.0
  %873 = vmatprep.subr.mxu0 0.0
  %874 = vmatpush2.msra.mxu0 0.0
  %875 = vmatprep.subr.mxu0 0.0
  %876 = vmatpush2.msra.mxu0 0.0
  %877 = vmatprep.subr.mxu0 0.0
  %878 = vmatpush2.msra.mxu0 0.0
  %879 = vmatprep.subr.mxu0 0.0
  %880 = vmatpush2.msra.mxu0 0.0
  %881 = vmatprep.subr.mxu0 0.0
  %882 = vmatpush2.msra.mxu0 0.0
  %883 = vmatprep.subr.mxu0 0.0
  %884 = vmatpush2.msra.mxu0 0.0
  %885 = vmatprep.subr.mxu0 0.0
  %886 = vmatpush2.msra.mxu0 0.0
  %887 = vmatprep.subr.mxu0 0.0
  %888 = vmatpush2.msra.mxu0 0.0
  %889 = vmatprep.subr.mxu0 0.0
  %890 = vmatpush2.msra.mxu0 0.0
  %891 = vmatprep.mubr.f32.mxu0 0.0
  %892 = vmatmul.mubr.f32.gmra.mxu0 %v780
  %v893 = vpop.f32.mrf.mxu0
  %v894 = vadd.f32 %v702, %v893
  %v895 = vpop.f32.mrf.mxu0
  %896 = vmatprep.mubr.f32.mxu0 0.0
  %897 = vmatmul.mubr.f32.gmra.mxu0 %v783
  %v898 = vpop.f32.mrf.mxu0
  %v899 = vadd.f32 %v707, %v898
  %v900 = vpop.f32.mrf.mxu0
  %901 = vmatprep.mubr.f32.mxu0 0.0
  %902 = vmatmul.mubr.f32.gmra.mxu0 %v786
  %v903 = vpop.f32.mrf.mxu0
  %v904 = vadd.f32 %v712, %v903
  %v905 = vpop.f32.mrf.mxu0
  %906 = vmatprep.mubr.f32.mxu0 0.0
  %907 = vmatmul.mubr.f32.gmra.mxu0 %v789
  %v908 = vpop.f32.mrf.mxu0
  %v909 = vadd.f32 %v717, %v908
  %v910 = vpop.f32.mrf.mxu0
  %911 = vmatprep.mubr.f32.mxu0 0.0
  %912 = vmatmul.mubr.f32.gmra.mxu0 %v792
  %v913 = vpop.f32.mrf.mxu0
  %v914 = vadd.f32 %v722, %v913
  %v915 = vpop.f32.mrf.mxu0
  %916 = vmatprep.mubr.f32.mxu0 0.0
  %917 = vmatmul.mubr.f32.gmra.mxu0 %v795
  %v918 = vpop.f32.mrf.mxu0
  %v919 = vadd.f32 %v727, %v918
  %v920 = vpop.f32.mrf.mxu0
  %921 = vmatprep.mubr.f32.mxu0 0.0
  %922 = vmatmul.mubr.f32.gmra.mxu0 %v798
  %v923 = vpop.f32.mrf.mxu0
  %v924 = vadd.f32 %v732, %v923
  %v925 = vpop.f32.mrf.mxu0
  %926 = vmatprep.mubr.f32.mxu0 0.0
  %927 = vmatmul.mubr.f32.gmra.mxu0 %v801
  %v928 = vpop.f32.mrf.mxu0
  %v929 = vadd.f32 %v737, %v928
  %v930 = vpop.f32.mrf.mxu0
  %931 = vmatprep.mubr.f32.mxu0 0.0
  %932 = vmatmul.mubr.f32.gmra.mxu0 %v804
  %v933 = vpop.f32.mrf.mxu0
  %v934 = vadd.f32 %v742, %v933
  %v935 = vpop.f32.mrf.mxu0
  %936 = vmatprep.mubr.f32.mxu0 0.0
  %937 = vmatmul.mubr.f32.gmra.mxu0 %v807
  %v938 = vpop.f32.mrf.mxu0
  %v939 = vadd.f32 %v747, %v938
  %v940 = vpop.f32.mrf.mxu0
  %941 = vmatprep.mubr.f32.mxu0 0.0
  %942 = vmatmul.mubr.f32.gmra.mxu0 %v810
  %v943 = vpop.f32.mrf.mxu0
  %v944 = vadd.f32 %v752, %v943
  %v945 = vpop.f32.mrf.mxu0
  %946 = vmatprep.mubr.f32.mxu0 0.0
  %947 = vmatmul.mubr.f32.gmra.mxu0 %v813
  %v948 = vpop.f32.mrf.mxu0
  %v949 = vadd.f32 %v757, %v948
  %v950 = vpop.f32.mrf.mxu0
  %951 = vmatprep.mubr.f32.mxu0 0.0
  %952 = vmatmul.mubr.f32.gmra.mxu0 %v816
  %v953 = vpop.f32.mrf.mxu0
  %v954 = vadd.f32 %v762, %v953
  %v955 = vpop.f32.mrf.mxu0
  %956 = vmatprep.mubr.f32.mxu0 0.0
  %957 = vmatmul.mubr.f32.gmra.mxu0 %v819
  %v958 = vpop.f32.mrf.mxu0
  %v959 = vadd.f32 %v767, %v958
  %v960 = vpop.f32.mrf.mxu0
  %961 = vmatprep.mubr.f32.mxu0 0.0
  %962 = vmatmul.mubr.f32.gmra.mxu0 %v822
  %v963 = vpop.f32.mrf.mxu0
  %v964 = vadd.f32 %v772, %v963
  %v965 = vpop.f32.mrf.mxu0
  %966 = vmatprep.mubr.f32.mxu0 0.0
  %967 = vmatmul.mubr.f32.gmra.mxu0 %v825
  %v968 = vpop.f32.mrf.mxu0
  %v969 = vadd.f32 %v777, %v968
  %v970 = vpop.f32.mrf.mxu0
  %971 = vdwg.mxu0
  %s972 = scalar_lea.vmem %s3, 256
  %973 = vst.msk [vmem:[%s972] sm:$0xff] %vm322, %v894
  %974 = vst.msk [vmem:[%s972 + $0x8] sm:$0xff] %vm322, %v899
  %975 = vst.msk [vmem:[%s972 + $0x10] sm:$0xff] %vm322, %v904
  %976 = vst.msk [vmem:[%s972 + $0x18] sm:$0xff] %vm322, %v909
  %977 = vst.msk [vmem:[%s972 + $0x20] sm:$0xff] %vm322, %v914
  %978 = vst.msk [vmem:[%s972 + $0x28] sm:$0xff] %vm322, %v919
  %979 = vst.msk [vmem:[%s972 + $0x30] sm:$0xff] %vm322, %v924
  %980 = vst.msk [vmem:[%s972 + $0x38] sm:$0xff] %vm322, %v929
  %981 = vst.msk [vmem:[%s972 + $0x40] sm:$0xff] %vm322, %v934
  %982 = vst.msk [vmem:[%s972 + $0x48] sm:$0xff] %vm322, %v939
  %983 = vst.msk [vmem:[%s972 + $0x50] sm:$0xff] %vm322, %v944
  %984 = vst.msk [vmem:[%s972 + $0x58] sm:$0xff] %vm322, %v949
  %985 = vst.msk [vmem:[%s972 + $0x60] sm:$0xff] %vm322, %v954
  %986 = vst.msk [vmem:[%s972 + $0x68] sm:$0xff] %vm322, %v959
  %987 = vst.msk [vmem:[%s972 + $0x70] sm:$0xff] %vm322, %v964
  %988 = vst.msk [vmem:[%s972 + $0x78] sm:$0xff] %vm322, %v969
  %v989 = vld [vmem:[%s1] sm:$0xff]
  %v990 = vld [vmem:[%s1 + $0x8] sm:$0xff]
  %v991 = vld [vmem:[%s1 + $0x10] sm:$0xff]
  %v992 = vld [vmem:[%s1 + $0x18] sm:$0xff]
  %v993 = vld [vmem:[%s1 + $0x20] sm:$0xff]
  %v994 = vld [vmem:[%s1 + $0x28] sm:$0xff]
  %v995 = vld [vmem:[%s1 + $0x30] sm:$0xff]
  %v996 = vld [vmem:[%s1 + $0x38] sm:$0xff]
  %v997 = vld [vmem:[%s1 + $0x40] sm:$0xff]
  %v998 = vld [vmem:[%s1 + $0x48] sm:$0xff]
  %v999 = vld [vmem:[%s1 + $0x50] sm:$0xff]
  %v1000 = vld [vmem:[%s1 + $0x58] sm:$0xff]
  %v1001 = vld [vmem:[%s1 + $0x60] sm:$0xff]
  %v1002 = vld [vmem:[%s1 + $0x68] sm:$0xff]
  %v1003 = vld [vmem:[%s1 + $0x70] sm:$0xff]
  %v1004 = vld [vmem:[%s1 + $0x78] sm:$0xff]
  %s1005 = scalar_lea.vmem %s0, 48
  %v1006 = vld [vmem:[%s1005] sm:$0xff]
  %v1007 = vld [vmem:[%s1005 + $0x8] sm:$0xff]
  %v1008 = vld [vmem:[%s2] sm:$0xff]
  %v1009 = vld [vmem:[%s2 + $0x8] sm:$0xff]
  %v1010 = vld [vmem:[%s2 + $0x10] sm:$0xff]
  %v1011 = vld [vmem:[%s2 + $0x18] sm:$0xff]
  %v1012 = vld [vmem:[%s2 + $0x20] sm:$0xff]
  %v1013 = vld [vmem:[%s2 + $0x28] sm:$0xff]
  %v1014 = vld [vmem:[%s2 + $0x30] sm:$0xff]
  %v1015 = vld [vmem:[%s2 + $0x38] sm:$0xff]
  %v1016 = vld [vmem:[%s2 + $0x40] sm:$0xff]
  %v1017 = vld [vmem:[%s2 + $0x48] sm:$0xff]
  %v1018 = vld [vmem:[%s2 + $0x50] sm:$0xff]
  %v1019 = vld [vmem:[%s2 + $0x58] sm:$0xff]
  %v1020 = vld [vmem:[%s2 + $0x60] sm:$0xff]
  %v1021 = vld [vmem:[%s2 + $0x68] sm:$0xff]
  %v1022 = vld [vmem:[%s2 + $0x70] sm:$0xff]
  %v1023 = vld [vmem:[%s2 + $0x78] sm:$0xff]
  %1025 = vset.pattern.permute.xlu0 0
  %1026 = vperm.xlu0 %1025, %v1008
  %v1027 = vpop.permute.xlu0 %1026
  %1030 = vset.pattern.permute.xlu0 0
  %1031 = vperm.xlu0 %1030, %v1009
  %v1032 = vpop.permute.xlu0 %1031
  %1035 = vset.pattern.permute.xlu0 0
  %1036 = vperm.xlu0 %1035, %v1010
  %v1037 = vpop.permute.xlu0 %1036
  %1040 = vset.pattern.permute.xlu0 0
  %1041 = vperm.xlu0 %1040, %v1011
  %v1042 = vpop.permute.xlu0 %1041
  %1045 = vset.pattern.permute.xlu0 0
  %1046 = vperm.xlu0 %1045, %v1012
  %v1047 = vpop.permute.xlu0 %1046
  %1050 = vset.pattern.permute.xlu0 0
  %1051 = vperm.xlu0 %1050, %v1013
  %v1052 = vpop.permute.xlu0 %1051
  %1055 = vset.pattern.permute.xlu0 0
  %1056 = vperm.xlu0 %1055, %v1014
  %v1057 = vpop.permute.xlu0 %1056
  %1060 = vset.pattern.permute.xlu0 0
  %1061 = vperm.xlu0 %1060, %v1015
  %v1062 = vpop.permute.xlu0 %1061
  %1065 = vset.pattern.permute.xlu0 0
  %1066 = vperm.xlu0 %1065, %v1016
  %v1067 = vpop.permute.xlu0 %1066
  %1070 = vset.pattern.permute.xlu0 0
  %1071 = vperm.xlu0 %1070, %v1017
  %v1072 = vpop.permute.xlu0 %1071
  %1075 = vset.pattern.permute.xlu0 0
  %1076 = vperm.xlu0 %1075, %v1018
  %v1077 = vpop.permute.xlu0 %1076
  %1080 = vset.pattern.permute.xlu0 0
  %1081 = vperm.xlu0 %1080, %v1019
  %v1082 = vpop.permute.xlu0 %1081
  %1085 = vset.pattern.permute.xlu0 0
  %1086 = vperm.xlu0 %1085, %v1020
  %v1087 = vpop.permute.xlu0 %1086
  %1090 = vset.pattern.permute.xlu0 0
  %1091 = vperm.xlu0 %1090, %v1021
  %v1092 = vpop.permute.xlu0 %1091
  %1095 = vset.pattern.permute.xlu0 0
  %1096 = vperm.xlu0 %1095, %v1022
  %v1097 = vpop.permute.xlu0 %1096
  %1100 = vset.pattern.permute.xlu0 0
  %1101 = vperm.xlu0 %1100, %v1023
  %v1102 = vpop.permute.xlu0 %1101
  %v1105 = vsel %vm128, %v989, 0
  %v1108 = vsel %vm128, %v990, 0
  %v1111 = vsel %vm128, %v991, 0
  %v1114 = vsel %vm128, %v992, 0
  %v1117 = vsel %vm128, %v993, 0
  %v1120 = vsel %vm128, %v994, 0
  %v1123 = vsel %vm128, %v995, 0
  %v1126 = vsel %vm128, %v996, 0
  %v1129 = vsel %vm128, %v997, 0
  %v1132 = vsel %vm128, %v998, 0
  %v1135 = vsel %vm128, %v999, 0
  %v1138 = vsel %vm128, %v1000, 0
  %v1141 = vsel %vm128, %v1001, 0
  %v1144 = vsel %vm128, %v1002, 0
  %v1147 = vsel %vm128, %v1003, 0
  %v1150 = vsel %vm128, %v1004, 0
  %1152 = vmatprep.subr.mxu0 0.0
  %1153 = vmatpush1.msra.mxu0 0.0
  %1154 = vmatprep.subr.mxu0 0.0
  %1155 = vmatpush1.msra.mxu0 0.0
  %1156 = vmatprep.subr.mxu0 0.0
  %1157 = vmatpush1.msra.mxu0 0.0
  %1158 = vmatprep.subr.mxu0 0.0
  %1159 = vmatpush1.msra.mxu0 0.0
  %1160 = vmatprep.subr.mxu0 0.0
  %1161 = vmatpush1.msra.mxu0 0.0
  %1162 = vmatprep.subr.mxu0 0.0
  %1163 = vmatpush1.msra.mxu0 0.0
  %1164 = vmatprep.subr.mxu0 0.0
  %1165 = vmatpush1.msra.mxu0 0.0
  %1166 = vmatprep.subr.mxu0 0.0
  %1167 = vmatpush1.msra.mxu0 0.0
  %1168 = vmatprep.subr.mxu0 0.0
  %1169 = vmatpush1.msra.mxu0 0.0
  %1170 = vmatprep.subr.mxu0 0.0
  %1171 = vmatpush1.msra.mxu0 0.0
  %1172 = vmatprep.subr.mxu0 0.0
  %1173 = vmatpush1.msra.mxu0 0.0
  %1174 = vmatprep.subr.mxu0 0.0
  %1175 = vmatpush1.msra.mxu0 0.0
  %1176 = vmatprep.subr.mxu0 0.0
  %1177 = vmatpush1.msra.mxu0 0.0
  %1178 = vmatprep.subr.mxu0 0.0
  %1179 = vmatpush1.msra.mxu0 0.0
  %1180 = vmatprep.subr.mxu0 0.0
  %1181 = vmatpush1.msra.mxu0 %v1007
  %1182 = vmatprep.subr.mxu0 0.0
  %1183 = vmatpush1.msra.mxu0 %v1006
  %1184 = vmatprep.subr.mxu0 0.0
  %1185 = vmatpush2.msra.mxu0 0.0
  %1186 = vmatprep.subr.mxu0 0.0
  %1187 = vmatpush2.msra.mxu0 0.0
  %1188 = vmatprep.subr.mxu0 0.0
  %1189 = vmatpush2.msra.mxu0 0.0
  %1190 = vmatprep.subr.mxu0 0.0
  %1191 = vmatpush2.msra.mxu0 0.0
  %1192 = vmatprep.subr.mxu0 0.0
  %1193 = vmatpush2.msra.mxu0 0.0
  %1194 = vmatprep.subr.mxu0 0.0
  %1195 = vmatpush2.msra.mxu0 0.0
  %1196 = vmatprep.subr.mxu0 0.0
  %1197 = vmatpush2.msra.mxu0 0.0
  %1198 = vmatprep.subr.mxu0 0.0
  %1199 = vmatpush2.msra.mxu0 0.0
  %1200 = vmatprep.subr.mxu0 0.0
  %1201 = vmatpush2.msra.mxu0 0.0
  %1202 = vmatprep.subr.mxu0 0.0
  %1203 = vmatpush2.msra.mxu0 0.0
  %1204 = vmatprep.subr.mxu0 0.0
  %1205 = vmatpush2.msra.mxu0 0.0
  %1206 = vmatprep.subr.mxu0 0.0
  %1207 = vmatpush2.msra.mxu0 0.0
  %1208 = vmatprep.subr.mxu0 0.0
  %1209 = vmatpush2.msra.mxu0 0.0
  %1210 = vmatprep.subr.mxu0 0.0
  %1211 = vmatpush2.msra.mxu0 0.0
  %1212 = vmatprep.subr.mxu0 0.0
  %1213 = vmatpush2.msra.mxu0 0.0
  %1214 = vmatprep.subr.mxu0 0.0
  %1215 = vmatpush2.msra.mxu0 0.0
  %1216 = vmatprep.mubr.f32.mxu0 0.0
  %1217 = vmatmul.mubr.f32.gmra.mxu0 %v1105
  %v1218 = vpop.f32.mrf.mxu0
  %v1219 = vadd.f32 %v1027, %v1218
  %v1220 = vpop.f32.mrf.mxu0
  %1221 = vmatprep.mubr.f32.mxu0 0.0
  %1222 = vmatmul.mubr.f32.gmra.mxu0 %v1108
  %v1223 = vpop.f32.mrf.mxu0
  %v1224 = vadd.f32 %v1032, %v1223
  %v1225 = vpop.f32.mrf.mxu0
  %1226 = vmatprep.mubr.f32.mxu0 0.0
  %1227 = vmatmul.mubr.f32.gmra.mxu0 %v1111
  %v1228 = vpop.f32.mrf.mxu0
  %v1229 = vadd.f32 %v1037, %v1228
  %v1230 = vpop.f32.mrf.mxu0
  %1231 = vmatprep.mubr.f32.mxu0 0.0
  %1232 = vmatmul.mubr.f32.gmra.mxu0 %v1114
  %v1233 = vpop.f32.mrf.mxu0
  %v1234 = vadd.f32 %v1042, %v1233
  %v1235 = vpop.f32.mrf.mxu0
  %1236 = vmatprep.mubr.f32.mxu0 0.0
  %1237 = vmatmul.mubr.f32.gmra.mxu0 %v1117
  %v1238 = vpop.f32.mrf.mxu0
  %v1239 = vadd.f32 %v1047, %v1238
  %v1240 = vpop.f32.mrf.mxu0
  %1241 = vmatprep.mubr.f32.mxu0 0.0
  %1242 = vmatmul.mubr.f32.gmra.mxu0 %v1120
  %v1243 = vpop.f32.mrf.mxu0
  %v1244 = vadd.f32 %v1052, %v1243
  %v1245 = vpop.f32.mrf.mxu0
  %1246 = vmatprep.mubr.f32.mxu0 0.0
  %1247 = vmatmul.mubr.f32.gmra.mxu0 %v1123
  %v1248 = vpop.f32.mrf.mxu0
  %v1249 = vadd.f32 %v1057, %v1248
  %v1250 = vpop.f32.mrf.mxu0
  %1251 = vmatprep.mubr.f32.mxu0 0.0
  %1252 = vmatmul.mubr.f32.gmra.mxu0 %v1126
  %v1253 = vpop.f32.mrf.mxu0
  %v1254 = vadd.f32 %v1062, %v1253
  %v1255 = vpop.f32.mrf.mxu0
  %1256 = vmatprep.mubr.f32.mxu0 0.0
  %1257 = vmatmul.mubr.f32.gmra.mxu0 %v1129
  %v1258 = vpop.f32.mrf.mxu0
  %v1259 = vadd.f32 %v1067, %v1258
  %v1260 = vpop.f32.mrf.mxu0
  %1261 = vmatprep.mubr.f32.mxu0 0.0
  %1262 = vmatmul.mubr.f32.gmra.mxu0 %v1132
  %v1263 = vpop.f32.mrf.mxu0
  %v1264 = vadd.f32 %v1072, %v1263
  %v1265 = vpop.f32.mrf.mxu0
  %1266 = vmatprep.mubr.f32.mxu0 0.0
  %1267 = vmatmul.mubr.f32.gmra.mxu0 %v1135
  %v1268 = vpop.f32.mrf.mxu0
  %v1269 = vadd.f32 %v1077, %v1268
  %v1270 = vpop.f32.mrf.mxu0
  %1271 = vmatprep.mubr.f32.mxu0 0.0
  %1272 = vmatmul.mubr.f32.gmra.mxu0 %v1138
  %v1273 = vpop.f32.mrf.mxu0
  %v1274 = vadd.f32 %v1082, %v1273
  %v1275 = vpop.f32.mrf.mxu0
  %1276 = vmatprep.mubr.f32.mxu0 0.0
  %1277 = vmatmul.mubr.f32.gmra.mxu0 %v1141
  %v1278 = vpop.f32.mrf.mxu0
  %v1279 = vadd.f32 %v1087, %v1278
  %v1280 = vpop.f32.mrf.mxu0
  %1281 = vmatprep.mubr.f32.mxu0 0.0
  %1282 = vmatmul.mubr.f32.gmra.mxu0 %v1144
  %v1283 = vpop.f32.mrf.mxu0
  %v1284 = vadd.f32 %v1092, %v1283
  %v1285 = vpop.f32.mrf.mxu0
  %1286 = vmatprep.mubr.f32.mxu0 0.0
  %1287 = vmatmul.mubr.f32.gmra.mxu0 %v1147
  %v1288 = vpop.f32.mrf.mxu0
  %v1289 = vadd.f32 %v1097, %v1288
  %v1290 = vpop.f32.mrf.mxu0
  %1291 = vmatprep.mubr.f32.mxu0 0.0
  %1292 = vmatmul.mubr.f32.gmra.mxu0 %v1150
  %v1293 = vpop.f32.mrf.mxu0
  %v1294 = vadd.f32 %v1102, %v1293
  %v1295 = vpop.f32.mrf.mxu0
  %1296 = vdwg.mxu0
  %s1297 = scalar_lea.vmem %s3, 384
  %1298 = vst.msk [vmem:[%s1297] sm:$0xff] %vm322, %v1219
  %1299 = vst.msk [vmem:[%s1297 + $0x8] sm:$0xff] %vm322, %v1224
  %1300 = vst.msk [vmem:[%s1297 + $0x10] sm:$0xff] %vm322, %v1229
  %1301 = vst.msk [vmem:[%s1297 + $0x18] sm:$0xff] %vm322, %v1234
  %1302 = vst.msk [vmem:[%s1297 + $0x20] sm:$0xff] %vm322, %v1239
  %1303 = vst.msk [vmem:[%s1297 + $0x28] sm:$0xff] %vm322, %v1244
  %1304 = vst.msk [vmem:[%s1297 + $0x30] sm:$0xff] %vm322, %v1249
  %1305 = vst.msk [vmem:[%s1297 + $0x38] sm:$0xff] %vm322, %v1254
  %1306 = vst.msk [vmem:[%s1297 + $0x40] sm:$0xff] %vm322, %v1259
  %1307 = vst.msk [vmem:[%s1297 + $0x48] sm:$0xff] %vm322, %v1264
  %1308 = vst.msk [vmem:[%s1297 + $0x50] sm:$0xff] %vm322, %v1269
  %1309 = vst.msk [vmem:[%s1297 + $0x58] sm:$0xff] %vm322, %v1274
  %1310 = vst.msk [vmem:[%s1297 + $0x60] sm:$0xff] %vm322, %v1279
  %1311 = vst.msk [vmem:[%s1297 + $0x68] sm:$0xff] %vm322, %v1284
  %1312 = vst.msk [vmem:[%s1297 + $0x70] sm:$0xff] %vm322, %v1289
  %1313 = vst.msk [vmem:[%s1297 + $0x78] sm:$0xff] %vm322, %v1294
  %v1314 = vld [vmem:[%s1] sm:$0xff]
  %v1315 = vld [vmem:[%s1 + $0x8] sm:$0xff]
  %v1316 = vld [vmem:[%s1 + $0x10] sm:$0xff]
  %v1317 = vld [vmem:[%s1 + $0x18] sm:$0xff]
  %v1318 = vld [vmem:[%s1 + $0x20] sm:$0xff]
  %v1319 = vld [vmem:[%s1 + $0x28] sm:$0xff]
  %v1320 = vld [vmem:[%s1 + $0x30] sm:$0xff]
  %v1321 = vld [vmem:[%s1 + $0x38] sm:$0xff]
  %v1322 = vld [vmem:[%s1 + $0x40] sm:$0xff]
  %v1323 = vld [vmem:[%s1 + $0x48] sm:$0xff]
  %v1324 = vld [vmem:[%s1 + $0x50] sm:$0xff]
  %v1325 = vld [vmem:[%s1 + $0x58] sm:$0xff]
  %v1326 = vld [vmem:[%s1 + $0x60] sm:$0xff]
  %v1327 = vld [vmem:[%s1 + $0x68] sm:$0xff]
  %v1328 = vld [vmem:[%s1 + $0x70] sm:$0xff]
  %v1329 = vld [vmem:[%s1 + $0x78] sm:$0xff]
  %s1330 = scalar_lea.vmem %s0, 64
  %v1331 = vld [vmem:[%s1330] sm:$0xff]
  %v1332 = vld [vmem:[%s1330 + $0x8] sm:$0xff]
  %v1333 = vld [vmem:[%s2] sm:$0xff]
  %v1334 = vld [vmem:[%s2 + $0x8] sm:$0xff]
  %v1335 = vld [vmem:[%s2 + $0x10] sm:$0xff]
  %v1336 = vld [vmem:[%s2 + $0x18] sm:$0xff]
  %v1337 = vld [vmem:[%s2 + $0x20] sm:$0xff]
  %v1338 = vld [vmem:[%s2 + $0x28] sm:$0xff]
  %v1339 = vld [vmem:[%s2 + $0x30] sm:$0xff]
  %v1340 = vld [vmem:[%s2 + $0x38] sm:$0xff]
  %v1341 = vld [vmem:[%s2 + $0x40] sm:$0xff]
  %v1342 = vld [vmem:[%s2 + $0x48] sm:$0xff]
  %v1343 = vld [vmem:[%s2 + $0x50] sm:$0xff]
  %v1344 = vld [vmem:[%s2 + $0x58] sm:$0xff]
  %v1345 = vld [vmem:[%s2 + $0x60] sm:$0xff]
  %v1346 = vld [vmem:[%s2 + $0x68] sm:$0xff]
  %v1347 = vld [vmem:[%s2 + $0x70] sm:$0xff]
  %v1348 = vld [vmem:[%s2 + $0x78] sm:$0xff]
  %1350 = vset.pattern.permute.xlu0 0
  %1351 = vperm.xlu0 %1350, %v1333
  %v1352 = vpop.permute.xlu0 %1351
  %1355 = vset.pattern.permute.xlu0 0
  %1356 = vperm.xlu0 %1355, %v1334
  %v1357 = vpop.permute.xlu0 %1356
  %1360 = vset.pattern.permute.xlu0 0
  %1361 = vperm.xlu0 %1360, %v1335
  %v1362 = vpop.permute.xlu0 %1361
  %1365 = vset.pattern.permute.xlu0 0
  %1366 = vperm.xlu0 %1365, %v1336
  %v1367 = vpop.permute.xlu0 %1366
  %1370 = vset.pattern.permute.xlu0 0
  %1371 = vperm.xlu0 %1370, %v1337
  %v1372 = vpop.permute.xlu0 %1371
  %1375 = vset.pattern.permute.xlu0 0
  %1376 = vperm.xlu0 %1375, %v1338
  %v1377 = vpop.permute.xlu0 %1376
  %1380 = vset.pattern.permute.xlu0 0
  %1381 = vperm.xlu0 %1380, %v1339
  %v1382 = vpop.permute.xlu0 %1381
  %1385 = vset.pattern.permute.xlu0 0
  %1386 = vperm.xlu0 %1385, %v1340
  %v1387 = vpop.permute.xlu0 %1386
  %1390 = vset.pattern.permute.xlu0 0
  %1391 = vperm.xlu0 %1390, %v1341
  %v1392 = vpop.permute.xlu0 %1391
  %1395 = vset.pattern.permute.xlu0 0
  %1396 = vperm.xlu0 %1395, %v1342
  %v1397 = vpop.permute.xlu0 %1396
  %1400 = vset.pattern.permute.xlu0 0
  %1401 = vperm.xlu0 %1400, %v1343
  %v1402 = vpop.permute.xlu0 %1401
  %1405 = vset.pattern.permute.xlu0 0
  %1406 = vperm.xlu0 %1405, %v1344
  %v1407 = vpop.permute.xlu0 %1406
  %1410 = vset.pattern.permute.xlu0 0
  %1411 = vperm.xlu0 %1410, %v1345
  %v1412 = vpop.permute.xlu0 %1411
  %1415 = vset.pattern.permute.xlu0 0
  %1416 = vperm.xlu0 %1415, %v1346
  %v1417 = vpop.permute.xlu0 %1416
  %1420 = vset.pattern.permute.xlu0 0
  %1421 = vperm.xlu0 %1420, %v1347
  %v1422 = vpop.permute.xlu0 %1421
  %1425 = vset.pattern.permute.xlu0 0
  %1426 = vperm.xlu0 %1425, %v1348
  %v1427 = vpop.permute.xlu0 %1426
  %v1430 = vsel %vm128, %v1314, 0
  %v1433 = vsel %vm128, %v1315, 0
  %v1436 = vsel %vm128, %v1316, 0
  %v1439 = vsel %vm128, %v1317, 0
  %v1442 = vsel %vm128, %v1318, 0
  %v1445 = vsel %vm128, %v1319, 0
  %v1448 = vsel %vm128, %v1320, 0
  %v1451 = vsel %vm128, %v1321, 0
  %v1454 = vsel %vm128, %v1322, 0
  %v1457 = vsel %vm128, %v1323, 0
  %v1460 = vsel %vm128, %v1324, 0
  %v1463 = vsel %vm128, %v1325, 0
  %v1466 = vsel %vm128, %v1326, 0
  %v1469 = vsel %vm128, %v1327, 0
  %v1472 = vsel %vm128, %v1328, 0
  %v1475 = vsel %vm128, %v1329, 0
  %1477 = vmatprep.subr.mxu0 0.0
  %1478 = vmatpush1.msra.mxu0 0.0
  %1479 = vmatprep.subr.mxu0 0.0
  %1480 = vmatpush1.msra.mxu0 0.0
  %1481 = vmatprep.subr.mxu0 0.0
  %1482 = vmatpush1.msra.mxu0 0.0
  %1483 = vmatprep.subr.mxu0 0.0
  %1484 = vmatpush1.msra.mxu0 0.0
  %1485 = vmatprep.subr.mxu0 0.0
  %1486 = vmatpush1.msra.mxu0 0.0
  %1487 = vmatprep.subr.mxu0 0.0
  %1488 = vmatpush1.msra.mxu0 0.0
  %1489 = vmatprep.subr.mxu0 0.0
  %1490 = vmatpush1.msra.mxu0 0.0
  %1491 = vmatprep.subr.mxu0 0.0
  %1492 = vmatpush1.msra.mxu0 0.0
  %1493 = vmatprep.subr.mxu0 0.0
  %1494 = vmatpush1.msra.mxu0 0.0
  %1495 = vmatprep.subr.mxu0 0.0
  %1496 = vmatpush1.msra.mxu0 0.0
  %1497 = vmatprep.subr.mxu0 0.0
  %1498 = vmatpush1.msra.mxu0 0.0
  %1499 = vmatprep.subr.mxu0 0.0
  %1500 = vmatpush1.msra.mxu0 0.0
  %1501 = vmatprep.subr.mxu0 0.0
  %1502 = vmatpush1.msra.mxu0 0.0
  %1503 = vmatprep.subr.mxu0 0.0
  %1504 = vmatpush1.msra.mxu0 0.0
  %1505 = vmatprep.subr.mxu0 0.0
  %1506 = vmatpush1.msra.mxu0 %v1332
  %1507 = vmatprep.subr.mxu0 0.0
  %1508 = vmatpush1.msra.mxu0 %v1331
  %1509 = vmatprep.subr.mxu0 0.0
  %1510 = vmatpush2.msra.mxu0 0.0
  %1511 = vmatprep.subr.mxu0 0.0
  %1512 = vmatpush2.msra.mxu0 0.0
  %1513 = vmatprep.subr.mxu0 0.0
  %1514 = vmatpush2.msra.mxu0 0.0
  %1515 = vmatprep.subr.mxu0 0.0
  %1516 = vmatpush2.msra.mxu0 0.0
  %1517 = vmatprep.subr.mxu0 0.0
  %1518 = vmatpush2.msra.mxu0 0.0
  %1519 = vmatprep.subr.mxu0 0.0
  %1520 = vmatpush2.msra.mxu0 0.0
  %1521 = vmatprep.subr.mxu0 0.0
  %1522 = vmatpush2.msra.mxu0 0.0
  %1523 = vmatprep.subr.mxu0 0.0
  %1524 = vmatpush2.msra.mxu0 0.0
  %1525 = vmatprep.subr.mxu0 0.0
  %1526 = vmatpush2.msra.mxu0 0.0
  %1527 = vmatprep.subr.mxu0 0.0
  %1528 = vmatpush2.msra.mxu0 0.0
  %1529 = vmatprep.subr.mxu0 0.0
  %1530 = vmatpush2.msra.mxu0 0.0
  %1531 = vmatprep.subr.mxu0 0.0
  %1532 = vmatpush2.msra.mxu0 0.0
  %1533 = vmatprep.subr.mxu0 0.0
  %1534 = vmatpush2.msra.mxu0 0.0
  %1535 = vmatprep.subr.mxu0 0.0
  %1536 = vmatpush2.msra.mxu0 0.0
  %1537 = vmatprep.subr.mxu0 0.0
  %1538 = vmatpush2.msra.mxu0 0.0
  %1539 = vmatprep.subr.mxu0 0.0
  %1540 = vmatpush2.msra.mxu0 0.0
  %1541 = vmatprep.mubr.f32.mxu0 0.0
  %1542 = vmatmul.mubr.f32.gmra.mxu0 %v1430
  %v1543 = vpop.f32.mrf.mxu0
  %v1544 = vadd.f32 %v1352, %v1543
  %v1545 = vpop.f32.mrf.mxu0
  %1546 = vmatprep.mubr.f32.mxu0 0.0
  %1547 = vmatmul.mubr.f32.gmra.mxu0 %v1433
  %v1548 = vpop.f32.mrf.mxu0
  %v1549 = vadd.f32 %v1357, %v1548
  %v1550 = vpop.f32.mrf.mxu0
  %1551 = vmatprep.mubr.f32.mxu0 0.0
  %1552 = vmatmul.mubr.f32.gmra.mxu0 %v1436
  %v1553 = vpop.f32.mrf.mxu0
  %v1554 = vadd.f32 %v1362, %v1553
  %v1555 = vpop.f32.mrf.mxu0
  %1556 = vmatprep.mubr.f32.mxu0 0.0
  %1557 = vmatmul.mubr.f32.gmra.mxu0 %v1439
  %v1558 = vpop.f32.mrf.mxu0
  %v1559 = vadd.f32 %v1367, %v1558
  %v1560 = vpop.f32.mrf.mxu0
  %1561 = vmatprep.mubr.f32.mxu0 0.0
  %1562 = vmatmul.mubr.f32.gmra.mxu0 %v1442
  %v1563 = vpop.f32.mrf.mxu0
  %v1564 = vadd.f32 %v1372, %v1563
  %v1565 = vpop.f32.mrf.mxu0
  %1566 = vmatprep.mubr.f32.mxu0 0.0
  %1567 = vmatmul.mubr.f32.gmra.mxu0 %v1445
  %v1568 = vpop.f32.mrf.mxu0
  %v1569 = vadd.f32 %v1377, %v1568
  %v1570 = vpop.f32.mrf.mxu0
  %1571 = vmatprep.mubr.f32.mxu0 0.0
  %1572 = vmatmul.mubr.f32.gmra.mxu0 %v1448
  %v1573 = vpop.f32.mrf.mxu0
  %v1574 = vadd.f32 %v1382, %v1573
  %v1575 = vpop.f32.mrf.mxu0
  %1576 = vmatprep.mubr.f32.mxu0 0.0
  %1577 = vmatmul.mubr.f32.gmra.mxu0 %v1451
  %v1578 = vpop.f32.mrf.mxu0
  %v1579 = vadd.f32 %v1387, %v1578
  %v1580 = vpop.f32.mrf.mxu0
  %1581 = vmatprep.mubr.f32.mxu0 0.0
  %1582 = vmatmul.mubr.f32.gmra.mxu0 %v1454
  %v1583 = vpop.f32.mrf.mxu0
  %v1584 = vadd.f32 %v1392, %v1583
  %v1585 = vpop.f32.mrf.mxu0
  %1586 = vmatprep.mubr.f32.mxu0 0.0
  %1587 = vmatmul.mubr.f32.gmra.mxu0 %v1457
  %v1588 = vpop.f32.mrf.mxu0
  %v1589 = vadd.f32 %v1397, %v1588
  %v1590 = vpop.f32.mrf.mxu0
  %1591 = vmatprep.mubr.f32.mxu0 0.0
  %1592 = vmatmul.mubr.f32.gmra.mxu0 %v1460
  %v1593 = vpop.f32.mrf.mxu0
  %v1594 = vadd.f32 %v1402, %v1593
  %v1595 = vpop.f32.mrf.mxu0
  %1596 = vmatprep.mubr.f32.mxu0 0.0
  %1597 = vmatmul.mubr.f32.gmra.mxu0 %v1463
  %v1598 = vpop.f32.mrf.mxu0
  %v1599 = vadd.f32 %v1407, %v1598
  %v1600 = vpop.f32.mrf.mxu0
  %1601 = vmatprep.mubr.f32.mxu0 0.0
  %1602 = vmatmul.mubr.f32.gmra.mxu0 %v1466
  %v1603 = vpop.f32.mrf.mxu0
  %v1604 = vadd.f32 %v1412, %v1603
  %v1605 = vpop.f32.mrf.mxu0
  %1606 = vmatprep.mubr.f32.mxu0 0.0
  %1607 = vmatmul.mubr.f32.gmra.mxu0 %v1469
  %v1608 = vpop.f32.mrf.mxu0
  %v1609 = vadd.f32 %v1417, %v1608
  %v1610 = vpop.f32.mrf.mxu0
  %1611 = vmatprep.mubr.f32.mxu0 0.0
  %1612 = vmatmul.mubr.f32.gmra.mxu0 %v1472
  %v1613 = vpop.f32.mrf.mxu0
  %v1614 = vadd.f32 %v1422, %v1613
  %v1615 = vpop.f32.mrf.mxu0
  %1616 = vmatprep.mubr.f32.mxu0 0.0
  %1617 = vmatmul.mubr.f32.gmra.mxu0 %v1475
  %v1618 = vpop.f32.mrf.mxu0
  %v1619 = vadd.f32 %v1427, %v1618
  %v1620 = vpop.f32.mrf.mxu0
  %1621 = vdwg.mxu0
  %s1622 = scalar_lea.vmem %s3, 512
  %1623 = vst.msk [vmem:[%s1622] sm:$0xff] %vm322, %v1544
  %1624 = vst.msk [vmem:[%s1622 + $0x8] sm:$0xff] %vm322, %v1549
  %1625 = vst.msk [vmem:[%s1622 + $0x10] sm:$0xff] %vm322, %v1554
  %1626 = vst.msk [vmem:[%s1622 + $0x18] sm:$0xff] %vm322, %v1559
  %1627 = vst.msk [vmem:[%s1622 + $0x20] sm:$0xff] %vm322, %v1564
  %1628 = vst.msk [vmem:[%s1622 + $0x28] sm:$0xff] %vm322, %v1569
  %1629 = vst.msk [vmem:[%s1622 + $0x30] sm:$0xff] %vm322, %v1574
  %1630 = vst.msk [vmem:[%s1622 + $0x38] sm:$0xff] %vm322, %v1579
  %1631 = vst.msk [vmem:[%s1622 + $0x40] sm:$0xff] %vm322, %v1584
  %1632 = vst.msk [vmem:[%s1622 + $0x48] sm:$0xff] %vm322, %v1589
  %1633 = vst.msk [vmem:[%s1622 + $0x50] sm:$0xff] %vm322, %v1594
  %1634 = vst.msk [vmem:[%s1622 + $0x58] sm:$0xff] %vm322, %v1599
  %1635 = vst.msk [vmem:[%s1622 + $0x60] sm:$0xff] %vm322, %v1604
  %1636 = vst.msk [vmem:[%s1622 + $0x68] sm:$0xff] %vm322, %v1609
  %1637 = vst.msk [vmem:[%s1622 + $0x70] sm:$0xff] %vm322, %v1614
  %1638 = vst.msk [vmem:[%s1622 + $0x78] sm:$0xff] %vm322, %v1619
  %v1639 = vld [vmem:[%s1] sm:$0xff]
  %v1640 = vld [vmem:[%s1 + $0x8] sm:$0xff]
  %v1641 = vld [vmem:[%s1 + $0x10] sm:$0xff]
  %v1642 = vld [vmem:[%s1 + $0x18] sm:$0xff]
  %v1643 = vld [vmem:[%s1 + $0x20] sm:$0xff]
  %v1644 = vld [vmem:[%s1 + $0x28] sm:$0xff]
  %v1645 = vld [vmem:[%s1 + $0x30] sm:$0xff]
  %v1646 = vld [vmem:[%s1 + $0x38] sm:$0xff]
  %v1647 = vld [vmem:[%s1 + $0x40] sm:$0xff]
  %v1648 = vld [vmem:[%s1 + $0x48] sm:$0xff]
  %v1649 = vld [vmem:[%s1 + $0x50] sm:$0xff]
  %v1650 = vld [vmem:[%s1 + $0x58] sm:$0xff]
  %v1651 = vld [vmem:[%s1 + $0x60] sm:$0xff]
  %v1652 = vld [vmem:[%s1 + $0x68] sm:$0xff]
  %v1653 = vld [vmem:[%s1 + $0x70] sm:$0xff]
  %v1654 = vld [vmem:[%s1 + $0x78] sm:$0xff]
  %s1655 = scalar_lea.vmem %s0, 80
  %v1656 = vld [vmem:[%s1655] sm:$0xff]
  %v1657 = vld [vmem:[%s1655 + $0x8] sm:$0xff]
  %v1658 = vld [vmem:[%s2] sm:$0xff]
  %v1659 = vld [vmem:[%s2 + $0x8] sm:$0xff]
  %v1660 = vld [vmem:[%s2 + $0x10] sm:$0xff]
  %v1661 = vld [vmem:[%s2 + $0x18] sm:$0xff]
  %v1662 = vld [vmem:[%s2 + $0x20] sm:$0xff]
  %v1663 = vld [vmem:[%s2 + $0x28] sm:$0xff]
  %v1664 = vld [vmem:[%s2 + $0x30] sm:$0xff]
  %v1665 = vld [vmem:[%s2 + $0x38] sm:$0xff]
  %v1666 = vld [vmem:[%s2 + $0x40] sm:$0xff]
  %v1667 = vld [vmem:[%s2 + $0x48] sm:$0xff]
  %v1668 = vld [vmem:[%s2 + $0x50] sm:$0xff]
  %v1669 = vld [vmem:[%s2 + $0x58] sm:$0xff]
  %v1670 = vld [vmem:[%s2 + $0x60] sm:$0xff]
  %v1671 = vld [vmem:[%s2 + $0x68] sm:$0xff]
  %v1672 = vld [vmem:[%s2 + $0x70] sm:$0xff]
  %v1673 = vld [vmem:[%s2 + $0x78] sm:$0xff]
  %1675 = vset.pattern.permute.xlu0 0
  %1676 = vperm.xlu0 %1675, %v1658
  %v1677 = vpop.permute.xlu0 %1676
  %1680 = vset.pattern.permute.xlu0 0
  %1681 = vperm.xlu0 %1680, %v1659
  %v1682 = vpop.permute.xlu0 %1681
  %1685 = vset.pattern.permute.xlu0 0
  %1686 = vperm.xlu0 %1685, %v1660
  %v1687 = vpop.permute.xlu0 %1686
  %1690 = vset.pattern.permute.xlu0 0
  %1691 = vperm.xlu0 %1690, %v1661
  %v1692 = vpop.permute.xlu0 %1691
  %1695 = vset.pattern.permute.xlu0 0
  %1696 = vperm.xlu0 %1695, %v1662
  %v1697 = vpop.permute.xlu0 %1696
  %1700 = vset.pattern.permute.xlu0 0
  %1701 = vperm.xlu0 %1700, %v1663
  %v1702 = vpop.permute.xlu0 %1701
  %1705 = vset.pattern.permute.xlu0 0
  %1706 = vperm.xlu0 %1705, %v1664
  %v1707 = vpop.permute.xlu0 %1706
  %1710 = vset.pattern.permute.xlu0 0
  %1711 = vperm.xlu0 %1710, %v1665
  %v1712 = vpop.permute.xlu0 %1711
  %1715 = vset.pattern.permute.xlu0 0
  %1716 = vperm.xlu0 %1715, %v1666
  %v1717 = vpop.permute.xlu0 %1716
  %1720 = vset.pattern.permute.xlu0 0
  %1721 = vperm.xlu0 %1720, %v1667
  %v1722 = vpop.permute.xlu0 %1721
  %1725 = vset.pattern.permute.xlu0 0
  %1726 = vperm.xlu0 %1725, %v1668
  %v1727 = vpop.permute.xlu0 %1726
  %1730 = vset.pattern.permute.xlu0 0
  %1731 = vperm.xlu0 %1730, %v1669
  %v1732 = vpop.permute.xlu0 %1731
  %1735 = vset.pattern.permute.xlu0 0
  %1736 = vperm.xlu0 %1735, %v1670
  %v1737 = vpop.permute.xlu0 %1736
  %1740 = vset.pattern.permute.xlu0 0
  %1741 = vperm.xlu0 %1740, %v1671
  %v1742 = vpop.permute.xlu0 %1741
  %1745 = vset.pattern.permute.xlu0 0
  %1746 = vperm.xlu0 %1745, %v1672
  %v1747 = vpop.permute.xlu0 %1746
  %1750 = vset.pattern.permute.xlu0 0
  %1751 = vperm.xlu0 %1750, %v1673
  %v1752 = vpop.permute.xlu0 %1751
  %v1755 = vsel %vm128, %v1639, 0
  %v1758 = vsel %vm128, %v1640, 0
  %v1761 = vsel %vm128, %v1641, 0
  %v1764 = vsel %vm128, %v1642, 0
  %v1767 = vsel %vm128, %v1643, 0
  %v1770 = vsel %vm128, %v1644, 0
  %v1773 = vsel %vm128, %v1645, 0
  %v1776 = vsel %vm128, %v1646, 0
  %v1779 = vsel %vm128, %v1647, 0
  %v1782 = vsel %vm128, %v1648, 0
  %v1785 = vsel %vm128, %v1649, 0
  %v1788 = vsel %vm128, %v1650, 0
  %v1791 = vsel %vm128, %v1651, 0
  %v1794 = vsel %vm128, %v1652, 0
  %v1797 = vsel %vm128, %v1653, 0
  %v1800 = vsel %vm128, %v1654, 0
  %1802 = vmatprep.subr.mxu0 0.0
  %1803 = vmatpush1.msra.mxu0 0.0
  %1804 = vmatprep.subr.mxu0 0.0
  %1805 = vmatpush1.msra.mxu0 0.0
  %1806 = vmatprep.subr.mxu0 0.0
  %1807 = vmatpush1.msra.mxu0 0.0
  %1808 = vmatprep.subr.mxu0 0.0
  %1809 = vmatpush1.msra.mxu0 0.0
  %1810 = vmatprep.subr.mxu0 0.0
  %1811 = vmatpush1.msra.mxu0 0.0
  %1812 = vmatprep.subr.mxu0 0.0
  %1813 = vmatpush1.msra.mxu0 0.0
  %1814 = vmatprep.subr.mxu0 0.0
  %1815 = vmatpush1.msra.mxu0 0.0
  %1816 = vmatprep.subr.mxu0 0.0
  %1817 = vmatpush1.msra.mxu0 0.0
  %1818 = vmatprep.subr.mxu0 0.0
  %1819 = vmatpush1.msra.mxu0 0.0
  %1820 = vmatprep.subr.mxu0 0.0
  %1821 = vmatpush1.msra.mxu0 0.0
  %1822 = vmatprep.subr.mxu0 0.0
  %1823 = vmatpush1.msra.mxu0 0.0
  %1824 = vmatprep.subr.mxu0 0.0
  %1825 = vmatpush1.msra.mxu0 0.0
  %1826 = vmatprep.subr.mxu0 0.0
  %1827 = vmatpush1.msra.mxu0 0.0
  %1828 = vmatprep.subr.mxu0 0.0
  %1829 = vmatpush1.msra.mxu0 0.0
  %1830 = vmatprep.subr.mxu0 0.0
  %1831 = vmatpush1.msra.mxu0 %v1657
  %1832 = vmatprep.subr.mxu0 0.0
  %1833 = vmatpush1.msra.mxu0 %v1656
  %1834 = vmatprep.subr.mxu0 0.0
  %1835 = vmatpush2.msra.mxu0 0.0
  %1836 = vmatprep.subr.mxu0 0.0
  %1837 = vmatpush2.msra.mxu0 0.0
  %1838 = vmatprep.subr.mxu0 0.0
  %1839 = vmatpush2.msra.mxu0 0.0
  %1840 = vmatprep.subr.mxu0 0.0
  %1841 = vmatpush2.msra.mxu0 0.0
  %1842 = vmatprep.subr.mxu0 0.0
  %1843 = vmatpush2.msra.mxu0 0.0
  %1844 = vmatprep.subr.mxu0 0.0
  %1845 = vmatpush2.msra.mxu0 0.0
  %1846 = vmatprep.subr.mxu0 0.0
  %1847 = vmatpush2.msra.mxu0 0.0
  %1848 = vmatprep.subr.mxu0 0.0
  %1849 = vmatpush2.msra.mxu0 0.0
  %1850 = vmatprep.subr.mxu0 0.0
  %1851 = vmatpush2.msra.mxu0 0.0
  %1852 = vmatprep.subr.mxu0 0.0
  %1853 = vmatpush2.msra.mxu0 0.0
  %1854 = vmatprep.subr.mxu0 0.0
  %1855 = vmatpush2.msra.mxu0 0.0
  %1856 = vmatprep.subr.mxu0 0.0
  %1857 = vmatpush2.msra.mxu0 0.0
  %1858 = vmatprep.subr.mxu0 0.0
  %1859 = vmatpush2.msra.mxu0 0.0
  %1860 = vmatprep.subr.mxu0 0.0
  %1861 = vmatpush2.msra.mxu0 0.0
  %1862 = vmatprep.subr.mxu0 0.0
  %1863 = vmatpush2.msra.mxu0 0.0
  %1864 = vmatprep.subr.mxu0 0.0
  %1865 = vmatpush2.msra.mxu0 0.0
  %1866 = vmatprep.mubr.f32.mxu0 0.0
  %1867 = vmatmul.mubr.f32.gmra.mxu0 %v1755
  %v1868 = vpop.f32.mrf.mxu0
  %v1869 = vadd.f32 %v1677, %v1868
  %v1870 = vpop.f32.mrf.mxu0
  %1871 = vmatprep.mubr.f32.mxu0 0.0
  %1872 = vmatmul.mubr.f32.gmra.mxu0 %v1758
  %v1873 = vpop.f32.mrf.mxu0
  %v1874 = vadd.f32 %v1682, %v1873
  %v1875 = vpop.f32.mrf.mxu0
  %1876 = vmatprep.mubr.f32.mxu0 0.0
  %1877 = vmatmul.mubr.f32.gmra.mxu0 %v1761
  %v1878 = vpop.f32.mrf.mxu0
  %v1879 = vadd.f32 %v1687, %v1878
  %v1880 = vpop.f32.mrf.mxu0
  %1881 = vmatprep.mubr.f32.mxu0 0.0
  %1882 = vmatmul.mubr.f32.gmra.mxu0 %v1764
  %v1883 = vpop.f32.mrf.mxu0
  %v1884 = vadd.f32 %v1692, %v1883
  %v1885 = vpop.f32.mrf.mxu0
  %1886 = vmatprep.mubr.f32.mxu0 0.0
  %1887 = vmatmul.mubr.f32.gmra.mxu0 %v1767
  %v1888 = vpop.f32.mrf.mxu0
  %v1889 = vadd.f32 %v1697, %v1888
  %v1890 = vpop.f32.mrf.mxu0
  %1891 = vmatprep.mubr.f32.mxu0 0.0
  %1892 = vmatmul.mubr.f32.gmra.mxu0 %v1770
  %v1893 = vpop.f32.mrf.mxu0
  %v1894 = vadd.f32 %v1702, %v1893
  %v1895 = vpop.f32.mrf.mxu0
  %1896 = vmatprep.mubr.f32.mxu0 0.0
  %1897 = vmatmul.mubr.f32.gmra.mxu0 %v1773
  %v1898 = vpop.f32.mrf.mxu0
  %v1899 = vadd.f32 %v1707, %v1898
  %v1900 = vpop.f32.mrf.mxu0
  %1901 = vmatprep.mubr.f32.mxu0 0.0
  %1902 = vmatmul.mubr.f32.gmra.mxu0 %v1776
  %v1903 = vpop.f32.mrf.mxu0
  %v1904 = vadd.f32 %v1712, %v1903
  %v1905 = vpop.f32.mrf.mxu0
  %1906 = vmatprep.mubr.f32.mxu0 0.0
  %1907 = vmatmul.mubr.f32.gmra.mxu0 %v1779
  %v1908 = vpop.f32.mrf.mxu0
  %v1909 = vadd.f32 %v1717, %v1908
  %v1910 = vpop.f32.mrf.mxu0
  %1911 = vmatprep.mubr.f32.mxu0 0.0
  %1912 = vmatmul.mubr.f32.gmra.mxu0 %v1782
  %v1913 = vpop.f32.mrf.mxu0
  %v1914 = vadd.f32 %v1722, %v1913
  %v1915 = vpop.f32.mrf.mxu0
  %1916 = vmatprep.mubr.f32.mxu0 0.0
  %1917 = vmatmul.mubr.f32.gmra.mxu0 %v1785
  %v1918 = vpop.f32.mrf.mxu0
  %v1919 = vadd.f32 %v1727, %v1918
  %v1920 = vpop.f32.mrf.mxu0
  %1921 = vmatprep.mubr.f32.mxu0 0.0
  %1922 = vmatmul.mubr.f32.gmra.mxu0 %v1788
  %v1923 = vpop.f32.mrf.mxu0
  %v1924 = vadd.f32 %v1732, %v1923
  %v1925 = vpop.f32.mrf.mxu0
  %1926 = vmatprep.mubr.f32.mxu0 0.0
  %1927 = vmatmul.mubr.f32.gmra.mxu0 %v1791
  %v1928 = vpop.f32.mrf.mxu0
  %v1929 = vadd.f32 %v1737, %v1928
  %v1930 = vpop.f32.mrf.mxu0
  %1931 = vmatprep.mubr.f32.mxu0 0.0
  %1932 = vmatmul.mubr.f32.gmra.mxu0 %v1794
  %v1933 = vpop.f32.mrf.mxu0
  %v1934 = vadd.f32 %v1742, %v1933
  %v1935 = vpop.f32.mrf.mxu0
  %1936 = vmatprep.mubr.f32.mxu0 0.0
  %1937 = vmatmul.mubr.f32.gmra.mxu0 %v1797
  %v1938 = vpop.f32.mrf.mxu0
  %v1939 = vadd.f32 %v1747, %v1938
  %v1940 = vpop.f32.mrf.mxu0
  %1941 = vmatprep.mubr.f32.mxu0 0.0
  %1942 = vmatmul.mubr.f32.gmra.mxu0 %v1800
  %v1943 = vpop.f32.mrf.mxu0
  %v1944 = vadd.f32 %v1752, %v1943
  %v1945 = vpop.f32.mrf.mxu0
  %1946 = vdwg.mxu0
  %s1947 = scalar_lea.vmem %s3, 640
  %1948 = vst.msk [vmem:[%s1947] sm:$0xff] %vm322, %v1869
  %1949 = vst.msk [vmem:[%s1947 + $0x8] sm:$0xff] %vm322, %v1874
  %1950 = vst.msk [vmem:[%s1947 + $0x10] sm:$0xff] %vm322, %v1879
  %1951 = vst.msk [vmem:[%s1947 + $0x18] sm:$0xff] %vm322, %v1884
  %1952 = vst.msk [vmem:[%s1947 + $0x20] sm:$0xff] %vm322, %v1889
  %1953 = vst.msk [vmem:[%s1947 + $0x28] sm:$0xff] %vm322, %v1894
  %1954 = vst.msk [vmem:[%s1947 + $0x30] sm:$0xff] %vm322, %v1899
  %1955 = vst.msk [vmem:[%s1947 + $0x38] sm:$0xff] %vm322, %v1904
  %1956 = vst.msk [vmem:[%s1947 + $0x40] sm:$0xff] %vm322, %v1909
  %1957 = vst.msk [vmem:[%s1947 + $0x48] sm:$0xff] %vm322, %v1914
  %1958 = vst.msk [vmem:[%s1947 + $0x50] sm:$0xff] %vm322, %v1919
  %1959 = vst.msk [vmem:[%s1947 + $0x58] sm:$0xff] %vm322, %v1924
  %1960 = vst.msk [vmem:[%s1947 + $0x60] sm:$0xff] %vm322, %v1929
  %1961 = vst.msk [vmem:[%s1947 + $0x68] sm:$0xff] %vm322, %v1934
  %1962 = vst.msk [vmem:[%s1947 + $0x70] sm:$0xff] %vm322, %v1939
  %1963 = vst.msk [vmem:[%s1947 + $0x78] sm:$0xff] %vm322, %v1944
  %v1964 = vld [vmem:[%s1] sm:$0xff]
  %v1965 = vld [vmem:[%s1 + $0x8] sm:$0xff]
  %v1966 = vld [vmem:[%s1 + $0x10] sm:$0xff]
  %v1967 = vld [vmem:[%s1 + $0x18] sm:$0xff]
  %v1968 = vld [vmem:[%s1 + $0x20] sm:$0xff]
  %v1969 = vld [vmem:[%s1 + $0x28] sm:$0xff]
  %v1970 = vld [vmem:[%s1 + $0x30] sm:$0xff]
  %v1971 = vld [vmem:[%s1 + $0x38] sm:$0xff]
  %v1972 = vld [vmem:[%s1 + $0x40] sm:$0xff]
  %v1973 = vld [vmem:[%s1 + $0x48] sm:$0xff]
  %v1974 = vld [vmem:[%s1 + $0x50] sm:$0xff]
  %v1975 = vld [vmem:[%s1 + $0x58] sm:$0xff]
  %v1976 = vld [vmem:[%s1 + $0x60] sm:$0xff]
  %v1977 = vld [vmem:[%s1 + $0x68] sm:$0xff]
  %v1978 = vld [vmem:[%s1 + $0x70] sm:$0xff]
  %v1979 = vld [vmem:[%s1 + $0x78] sm:$0xff]
  %s1980 = scalar_lea.vmem %s0, 96
  %v1981 = vld [vmem:[%s1980] sm:$0xff]
  %v1982 = vld [vmem:[%s1980 + $0x8] sm:$0xff]
  %v1983 = vld [vmem:[%s2] sm:$0xff]
  %v1984 = vld [vmem:[%s2 + $0x8] sm:$0xff]
  %v1985 = vld [vmem:[%s2 + $0x10] sm:$0xff]
  %v1986 = vld [vmem:[%s2 + $0x18] sm:$0xff]
  %v1987 = vld [vmem:[%s2 + $0x20] sm:$0xff]
  %v1988 = vld [vmem:[%s2 + $0x28] sm:$0xff]
  %v1989 = vld [vmem:[%s2 + $0x30] sm:$0xff]
  %v1990 = vld [vmem:[%s2 + $0x38] sm:$0xff]
  %v1991 = vld [vmem:[%s2 + $0x40] sm:$0xff]
  %v1992 = vld [vmem:[%s2 + $0x48] sm:$0xff]
  %v1993 = vld [vmem:[%s2 + $0x50] sm:$0xff]
  %v1994 = vld [vmem:[%s2 + $0x58] sm:$0xff]
  %v1995 = vld [vmem:[%s2 + $0x60] sm:$0xff]
  %v1996 = vld [vmem:[%s2 + $0x68] sm:$0xff]
  %v1997 = vld [vmem:[%s2 + $0x70] sm:$0xff]
  %v1998 = vld [vmem:[%s2 + $0x78] sm:$0xff]
  %2000 = vset.pattern.permute.xlu0 0
  %2001 = vperm.xlu0 %2000, %v1983
  %v2002 = vpop.permute.xlu0 %2001
  %2005 = vset.pattern.permute.xlu0 0
  %2006 = vperm.xlu0 %2005, %v1984
  %v2007 = vpop.permute.xlu0 %2006
  %2010 = vset.pattern.permute.xlu0 0
  %2011 = vperm.xlu0 %2010, %v1985
  %v2012 = vpop.permute.xlu0 %2011
  %2015 = vset.pattern.permute.xlu0 0
  %2016 = vperm.xlu0 %2015, %v1986
  %v2017 = vpop.permute.xlu0 %2016
  %2020 = vset.pattern.permute.xlu0 0
  %2021 = vperm.xlu0 %2020, %v1987
  %v2022 = vpop.permute.xlu0 %2021
  %2025 = vset.pattern.permute.xlu0 0
  %2026 = vperm.xlu0 %2025, %v1988
  %v2027 = vpop.permute.xlu0 %2026
  %2030 = vset.pattern.permute.xlu0 0
  %2031 = vperm.xlu0 %2030, %v1989
  %v2032 = vpop.permute.xlu0 %2031
  %2035 = vset.pattern.permute.xlu0 0
  %2036 = vperm.xlu0 %2035, %v1990
  %v2037 = vpop.permute.xlu0 %2036
  %2040 = vset.pattern.permute.xlu0 0
  %2041 = vperm.xlu0 %2040, %v1991
  %v2042 = vpop.permute.xlu0 %2041
  %2045 = vset.pattern.permute.xlu0 0
  %2046 = vperm.xlu0 %2045, %v1992
  %v2047 = vpop.permute.xlu0 %2046
  %2050 = vset.pattern.permute.xlu0 0
  %2051 = vperm.xlu0 %2050, %v1993
  %v2052 = vpop.permute.xlu0 %2051
  %2055 = vset.pattern.permute.xlu0 0
  %2056 = vperm.xlu0 %2055, %v1994
  %v2057 = vpop.permute.xlu0 %2056
  %2060 = vset.pattern.permute.xlu0 0
  %2061 = vperm.xlu0 %2060, %v1995
  %v2062 = vpop.permute.xlu0 %2061
  %2065 = vset.pattern.permute.xlu0 0
  %2066 = vperm.xlu0 %2065, %v1996
  %v2067 = vpop.permute.xlu0 %2066
  %2070 = vset.pattern.permute.xlu0 0
  %2071 = vperm.xlu0 %2070, %v1997
  %v2072 = vpop.permute.xlu0 %2071
  %2075 = vset.pattern.permute.xlu0 0
  %2076 = vperm.xlu0 %2075, %v1998
  %v2077 = vpop.permute.xlu0 %2076
  %v2080 = vsel %vm128, %v1964, 0
  %v2083 = vsel %vm128, %v1965, 0
  %v2086 = vsel %vm128, %v1966, 0
  %v2089 = vsel %vm128, %v1967, 0
  %v2092 = vsel %vm128, %v1968, 0
  %v2095 = vsel %vm128, %v1969, 0
  %v2098 = vsel %vm128, %v1970, 0
  %v2101 = vsel %vm128, %v1971, 0
  %v2104 = vsel %vm128, %v1972, 0
  %v2107 = vsel %vm128, %v1973, 0
  %v2110 = vsel %vm128, %v1974, 0
  %v2113 = vsel %vm128, %v1975, 0
  %v2116 = vsel %vm128, %v1976, 0
  %v2119 = vsel %vm128, %v1977, 0
  %v2122 = vsel %vm128, %v1978, 0
  %v2125 = vsel %vm128, %v1979, 0
  %2127 = vmatprep.subr.mxu0 0.0
  %2128 = vmatpush1.msra.mxu0 0.0
  %2129 = vmatprep.subr.mxu0 0.0
  %2130 = vmatpush1.msra.mxu0 0.0
  %2131 = vmatprep.subr.mxu0 0.0
  %2132 = vmatpush1.msra.mxu0 0.0
  %2133 = vmatprep.subr.mxu0 0.0
  %2134 = vmatpush1.msra.mxu0 0.0
  %2135 = vmatprep.subr.mxu0 0.0
  %2136 = vmatpush1.msra.mxu0 0.0
  %2137 = vmatprep.subr.mxu0 0.0
  %2138 = vmatpush1.msra.mxu0 0.0
  %2139 = vmatprep.subr.mxu0 0.0
  %2140 = vmatpush1.msra.mxu0 0.0
  %2141 = vmatprep.subr.mxu0 0.0
  %2142 = vmatpush1.msra.mxu0 0.0
  %2143 = vmatprep.subr.mxu0 0.0
  %2144 = vmatpush1.msra.mxu0 0.0
  %2145 = vmatprep.subr.mxu0 0.0
  %2146 = vmatpush1.msra.mxu0 0.0
  %2147 = vmatprep.subr.mxu0 0.0
  %2148 = vmatpush1.msra.mxu0 0.0
  %2149 = vmatprep.subr.mxu0 0.0
  %2150 = vmatpush1.msra.mxu0 0.0
  %2151 = vmatprep.subr.mxu0 0.0
  %2152 = vmatpush1.msra.mxu0 0.0
  %2153 = vmatprep.subr.mxu0 0.0
  %2154 = vmatpush1.msra.mxu0 0.0
  %2155 = vmatprep.subr.mxu0 0.0
  %2156 = vmatpush1.msra.mxu0 %v1982
  %2157 = vmatprep.subr.mxu0 0.0
  %2158 = vmatpush1.msra.mxu0 %v1981
  %2159 = vmatprep.subr.mxu0 0.0
  %2160 = vmatpush2.msra.mxu0 0.0
  %2161 = vmatprep.subr.mxu0 0.0
  %2162 = vmatpush2.msra.mxu0 0.0
  %2163 = vmatprep.subr.mxu0 0.0
  %2164 = vmatpush2.msra.mxu0 0.0
  %2165 = vmatprep.subr.mxu0 0.0
  %2166 = vmatpush2.msra.mxu0 0.0
  %2167 = vmatprep.subr.mxu0 0.0
  %2168 = vmatpush2.msra.mxu0 0.0
  %2169 = vmatprep.subr.mxu0 0.0
  %2170 = vmatpush2.msra.mxu0 0.0
  %2171 = vmatprep.subr.mxu0 0.0
  %2172 = vmatpush2.msra.mxu0 0.0
  %2173 = vmatprep.subr.mxu0 0.0
  %2174 = vmatpush2.msra.mxu0 0.0
  %2175 = vmatprep.subr.mxu0 0.0
  %2176 = vmatpush2.msra.mxu0 0.0
  %2177 = vmatprep.subr.mxu0 0.0
  %2178 = vmatpush2.msra.mxu0 0.0
  %2179 = vmatprep.subr.mxu0 0.0
  %2180 = vmatpush2.msra.mxu0 0.0
  %2181 = vmatprep.subr.mxu0 0.0
  %2182 = vmatpush2.msra.mxu0 0.0
  %2183 = vmatprep.subr.mxu0 0.0
  %2184 = vmatpush2.msra.mxu0 0.0
  %2185 = vmatprep.subr.mxu0 0.0
  %2186 = vmatpush2.msra.mxu0 0.0
  %2187 = vmatprep.subr.mxu0 0.0
  %2188 = vmatpush2.msra.mxu0 0.0
  %2189 = vmatprep.subr.mxu0 0.0
  %2190 = vmatpush2.msra.mxu0 0.0
  %2191 = vmatprep.mubr.f32.mxu0 0.0
  %2192 = vmatmul.mubr.f32.gmra.mxu0 %v2080
  %v2193 = vpop.f32.mrf.mxu0
  %v2194 = vadd.f32 %v2002, %v2193
  %v2195 = vpop.f32.mrf.mxu0
  %2196 = vmatprep.mubr.f32.mxu0 0.0
  %2197 = vmatmul.mubr.f32.gmra.mxu0 %v2083
  %v2198 = vpop.f32.mrf.mxu0
  %v2199 = vadd.f32 %v2007, %v2198
  %v2200 = vpop.f32.mrf.mxu0
  %2201 = vmatprep.mubr.f32.mxu0 0.0
  %2202 = vmatmul.mubr.f32.gmra.mxu0 %v2086
  %v2203 = vpop.f32.mrf.mxu0
  %v2204 = vadd.f32 %v2012, %v2203
  %v2205 = vpop.f32.mrf.mxu0
  %2206 = vmatprep.mubr.f32.mxu0 0.0
  %2207 = vmatmul.mubr.f32.gmra.mxu0 %v2089
  %v2208 = vpop.f32.mrf.mxu0
  %v2209 = vadd.f32 %v2017, %v2208
  %v2210 = vpop.f32.mrf.mxu0
  %2211 = vmatprep.mubr.f32.mxu0 0.0
  %2212 = vmatmul.mubr.f32.gmra.mxu0 %v2092
  %v2213 = vpop.f32.mrf.mxu0
  %v2214 = vadd.f32 %v2022, %v2213
  %v2215 = vpop.f32.mrf.mxu0
  %2216 = vmatprep.mubr.f32.mxu0 0.0
  %2217 = vmatmul.mubr.f32.gmra.mxu0 %v2095
  %v2218 = vpop.f32.mrf.mxu0
  %v2219 = vadd.f32 %v2027, %v2218
  %v2220 = vpop.f32.mrf.mxu0
  %2221 = vmatprep.mubr.f32.mxu0 0.0
  %2222 = vmatmul.mubr.f32.gmra.mxu0 %v2098
  %v2223 = vpop.f32.mrf.mxu0
  %v2224 = vadd.f32 %v2032, %v2223
  %v2225 = vpop.f32.mrf.mxu0
  %2226 = vmatprep.mubr.f32.mxu0 0.0
  %2227 = vmatmul.mubr.f32.gmra.mxu0 %v2101
  %v2228 = vpop.f32.mrf.mxu0
  %v2229 = vadd.f32 %v2037, %v2228
  %v2230 = vpop.f32.mrf.mxu0
  %2231 = vmatprep.mubr.f32.mxu0 0.0
  %2232 = vmatmul.mubr.f32.gmra.mxu0 %v2104
  %v2233 = vpop.f32.mrf.mxu0
  %v2234 = vadd.f32 %v2042, %v2233
  %v2235 = vpop.f32.mrf.mxu0
  %2236 = vmatprep.mubr.f32.mxu0 0.0
  %2237 = vmatmul.mubr.f32.gmra.mxu0 %v2107
  %v2238 = vpop.f32.mrf.mxu0
  %v2239 = vadd.f32 %v2047, %v2238
  %v2240 = vpop.f32.mrf.mxu0
  %2241 = vmatprep.mubr.f32.mxu0 0.0
  %2242 = vmatmul.mubr.f32.gmra.mxu0 %v2110
  %v2243 = vpop.f32.mrf.mxu0
  %v2244 = vadd.f32 %v2052, %v2243
  %v2245 = vpop.f32.mrf.mxu0
  %2246 = vmatprep.mubr.f32.mxu0 0.0
  %2247 = vmatmul.mubr.f32.gmra.mxu0 %v2113
  %v2248 = vpop.f32.mrf.mxu0
  %v2249 = vadd.f32 %v2057, %v2248
  %v2250 = vpop.f32.mrf.mxu0
  %2251 = vmatprep.mubr.f32.mxu0 0.0
  %2252 = vmatmul.mubr.f32.gmra.mxu0 %v2116
  %v2253 = vpop.f32.mrf.mxu0
  %v2254 = vadd.f32 %v2062, %v2253
  %v2255 = vpop.f32.mrf.mxu0
  %2256 = vmatprep.mubr.f32.mxu0 0.0
  %2257 = vmatmul.mubr.f32.gmra.mxu0 %v2119
  %v2258 = vpop.f32.mrf.mxu0
  %v2259 = vadd.f32 %v2067, %v2258
  %v2260 = vpop.f32.mrf.mxu0
  %2261 = vmatprep.mubr.f32.mxu0 0.0
  %2262 = vmatmul.mubr.f32.gmra.mxu0 %v2122
  %v2263 = vpop.f32.mrf.mxu0
  %v2264 = vadd.f32 %v2072, %v2263
  %v2265 = vpop.f32.mrf.mxu0
  %2266 = vmatprep.mubr.f32.mxu0 0.0
  %2267 = vmatmul.mubr.f32.gmra.mxu0 %v2125
  %v2268 = vpop.f32.mrf.mxu0
  %v2269 = vadd.f32 %v2077, %v2268
  %v2270 = vpop.f32.mrf.mxu0
  %2271 = vdwg.mxu0
  %s2272 = scalar_lea.vmem %s3, 768
  %2273 = vst.msk [vmem:[%s2272] sm:$0xff] %vm322, %v2194
  %2274 = vst.msk [vmem:[%s2272 + $0x8] sm:$0xff] %vm322, %v2199
  %2275 = vst.msk [vmem:[%s2272 + $0x10] sm:$0xff] %vm322, %v2204
  %2276 = vst.msk [vmem:[%s2272 + $0x18] sm:$0xff] %vm322, %v2209
  %2277 = vst.msk [vmem:[%s2272 + $0x20] sm:$0xff] %vm322, %v2214
  %2278 = vst.msk [vmem:[%s2272 + $0x28] sm:$0xff] %vm322, %v2219
  %2279 = vst.msk [vmem:[%s2272 + $0x30] sm:$0xff] %vm322, %v2224
  %2280 = vst.msk [vmem:[%s2272 + $0x38] sm:$0xff] %vm322, %v2229
  %2281 = vst.msk [vmem:[%s2272 + $0x40] sm:$0xff] %vm322, %v2234
  %2282 = vst.msk [vmem:[%s2272 + $0x48] sm:$0xff] %vm322, %v2239
  %2283 = vst.msk [vmem:[%s2272 + $0x50] sm:$0xff] %vm322, %v2244
  %2284 = vst.msk [vmem:[%s2272 + $0x58] sm:$0xff] %vm322, %v2249
  %2285 = vst.msk [vmem:[%s2272 + $0x60] sm:$0xff] %vm322, %v2254
  %2286 = vst.msk [vmem:[%s2272 + $0x68] sm:$0xff] %vm322, %v2259
  %2287 = vst.msk [vmem:[%s2272 + $0x70] sm:$0xff] %vm322, %v2264
  %2288 = vst.msk [vmem:[%s2272 + $0x78] sm:$0xff] %vm322, %v2269
  %v2289 = vld [vmem:[%s1] sm:$0xff]
  %v2290 = vld [vmem:[%s1 + $0x8] sm:$0xff]
  %v2291 = vld [vmem:[%s1 + $0x10] sm:$0xff]
  %v2292 = vld [vmem:[%s1 + $0x18] sm:$0xff]
  %v2293 = vld [vmem:[%s1 + $0x20] sm:$0xff]
  %v2294 = vld [vmem:[%s1 + $0x28] sm:$0xff]
  %v2295 = vld [vmem:[%s1 + $0x30] sm:$0xff]
  %v2296 = vld [vmem:[%s1 + $0x38] sm:$0xff]
  %v2297 = vld [vmem:[%s1 + $0x40] sm:$0xff]
  %v2298 = vld [vmem:[%s1 + $0x48] sm:$0xff]
  %v2299 = vld [vmem:[%s1 + $0x50] sm:$0xff]
  %v2300 = vld [vmem:[%s1 + $0x58] sm:$0xff]
  %v2301 = vld [vmem:[%s1 + $0x60] sm:$0xff]
  %v2302 = vld [vmem:[%s1 + $0x68] sm:$0xff]
  %v2303 = vld [vmem:[%s1 + $0x70] sm:$0xff]
  %v2304 = vld [vmem:[%s1 + $0x78] sm:$0xff]
  %s2305 = scalar_lea.vmem %s0, 112
  %v2306 = vld [vmem:[%s2305] sm:$0xff]
  %v2307 = vld [vmem:[%s2305 + $0x8] sm:$0xff]
  %v2308 = vld [vmem:[%s2] sm:$0xff]
  %v2309 = vld [vmem:[%s2 + $0x8] sm:$0xff]
  %v2310 = vld [vmem:[%s2 + $0x10] sm:$0xff]
  %v2311 = vld [vmem:[%s2 + $0x18] sm:$0xff]
  %v2312 = vld [vmem:[%s2 + $0x20] sm:$0xff]
  %v2313 = vld [vmem:[%s2 + $0x28] sm:$0xff]
  %v2314 = vld [vmem:[%s2 + $0x30] sm:$0xff]
  %v2315 = vld [vmem:[%s2 + $0x38] sm:$0xff]
  %v2316 = vld [vmem:[%s2 + $0x40] sm:$0xff]
  %v2317 = vld [vmem:[%s2 + $0x48] sm:$0xff]
  %v2318 = vld [vmem:[%s2 + $0x50] sm:$0xff]
  %v2319 = vld [vmem:[%s2 + $0x58] sm:$0xff]
  %v2320 = vld [vmem:[%s2 + $0x60] sm:$0xff]
  %v2321 = vld [vmem:[%s2 + $0x68] sm:$0xff]
  %v2322 = vld [vmem:[%s2 + $0x70] sm:$0xff]
  %v2323 = vld [vmem:[%s2 + $0x78] sm:$0xff]
  %2325 = vset.pattern.permute.xlu0 0
  %2326 = vperm.xlu0 %2325, %v2308
  %v2327 = vpop.permute.xlu0 %2326
  %2330 = vset.pattern.permute.xlu0 0
  %2331 = vperm.xlu0 %2330, %v2309
  %v2332 = vpop.permute.xlu0 %2331
  %2335 = vset.pattern.permute.xlu0 0
  %2336 = vperm.xlu0 %2335, %v2310
  %v2337 = vpop.permute.xlu0 %2336
  %2340 = vset.pattern.permute.xlu0 0
  %2341 = vperm.xlu0 %2340, %v2311
  %v2342 = vpop.permute.xlu0 %2341
  %2345 = vset.pattern.permute.xlu0 0
  %2346 = vperm.xlu0 %2345, %v2312
  %v2347 = vpop.permute.xlu0 %2346
  %2350 = vset.pattern.permute.xlu0 0
  %2351 = vperm.xlu0 %2350, %v2313
  %v2352 = vpop.permute.xlu0 %2351
  %2355 = vset.pattern.permute.xlu0 0
  %2356 = vperm.xlu0 %2355, %v2314
  %v2357 = vpop.permute.xlu0 %2356
  %2360 = vset.pattern.permute.xlu0 0
  %2361 = vperm.xlu0 %2360, %v2315
  %v2362 = vpop.permute.xlu0 %2361
  %2365 = vset.pattern.permute.xlu0 0
  %2366 = vperm.xlu0 %2365, %v2316
  %v2367 = vpop.permute.xlu0 %2366
  %2370 = vset.pattern.permute.xlu0 0
  %2371 = vperm.xlu0 %2370, %v2317
  %v2372 = vpop.permute.xlu0 %2371
  %2375 = vset.pattern.permute.xlu0 0
  %2376 = vperm.xlu0 %2375, %v2318
  %v2377 = vpop.permute.xlu0 %2376
  %2380 = vset.pattern.permute.xlu0 0
  %2381 = vperm.xlu0 %2380, %v2319
  %v2382 = vpop.permute.xlu0 %2381
  %2385 = vset.pattern.permute.xlu0 0
  %2386 = vperm.xlu0 %2385, %v2320
  %v2387 = vpop.permute.xlu0 %2386
  %2390 = vset.pattern.permute.xlu0 0
  %2391 = vperm.xlu0 %2390, %v2321
  %v2392 = vpop.permute.xlu0 %2391
  %2395 = vset.pattern.permute.xlu0 0
  %2396 = vperm.xlu0 %2395, %v2322
  %v2397 = vpop.permute.xlu0 %2396
  %2400 = vset.pattern.permute.xlu0 0
  %2401 = vperm.xlu0 %2400, %v2323
  %v2402 = vpop.permute.xlu0 %2401
  %v2405 = vsel %vm128, %v2289, 0
  %v2408 = vsel %vm128, %v2290, 0
  %v2411 = vsel %vm128, %v2291, 0
  %v2414 = vsel %vm128, %v2292, 0
  %v2417 = vsel %vm128, %v2293, 0
  %v2420 = vsel %vm128, %v2294, 0
  %v2423 = vsel %vm128, %v2295, 0
  %v2426 = vsel %vm128, %v2296, 0
  %v2429 = vsel %vm128, %v2297, 0
  %v2432 = vsel %vm128, %v2298, 0
  %v2435 = vsel %vm128, %v2299, 0
  %v2438 = vsel %vm128, %v2300, 0
  %v2441 = vsel %vm128, %v2301, 0
  %v2444 = vsel %vm128, %v2302, 0
  %v2447 = vsel %vm128, %v2303, 0
  %v2450 = vsel %vm128, %v2304, 0
  %2452 = vmatprep.subr.mxu0 0.0
  %2453 = vmatpush1.msra.mxu0 0.0
  %2454 = vmatprep.subr.mxu0 0.0
  %2455 = vmatpush1.msra.mxu0 0.0
  %2456 = vmatprep.subr.mxu0 0.0
  %2457 = vmatpush1.msra.mxu0 0.0
  %2458 = vmatprep.subr.mxu0 0.0
  %2459 = vmatpush1.msra.mxu0 0.0
  %2460 = vmatprep.subr.mxu0 0.0
  %2461 = vmatpush1.msra.mxu0 0.0
  %2462 = vmatprep.subr.mxu0 0.0
  %2463 = vmatpush1.msra.mxu0 0.0
  %2464 = vmatprep.subr.mxu0 0.0
  %2465 = vmatpush1.msra.mxu0 0.0
  %2466 = vmatprep.subr.mxu0 0.0
  %2467 = vmatpush1.msra.mxu0 0.0
  %2468 = vmatprep.subr.mxu0 0.0
  %2469 = vmatpush1.msra.mxu0 0.0
  %2470 = vmatprep.subr.mxu0 0.0
  %2471 = vmatpush1.msra.mxu0 0.0
  %2472 = vmatprep.subr.mxu0 0.0
  %2473 = vmatpush1.msra.mxu0 0.0
  %2474 = vmatprep.subr.mxu0 0.0
  %2475 = vmatpush1.msra.mxu0 0.0
  %2476 = vmatprep.subr.mxu0 0.0
  %2477 = vmatpush1.msra.mxu0 0.0
  %2478 = vmatprep.subr.mxu0 0.0
  %2479 = vmatpush1.msra.mxu0 0.0
  %2480 = vmatprep.subr.mxu0 0.0
  %2481 = vmatpush1.msra.mxu0 %v2307
  %2482 = vmatprep.subr.mxu0 0.0
  %2483 = vmatpush1.msra.mxu0 %v2306
  %2484 = vmatprep.subr.mxu0 0.0
  %2485 = vmatpush2.msra.mxu0 0.0
  %2486 = vmatprep.subr.mxu0 0.0
  %2487 = vmatpush2.msra.mxu0 0.0
  %2488 = vmatprep.subr.mxu0 0.0
  %2489 = vmatpush2.msra.mxu0 0.0
  %2490 = vmatprep.subr.mxu0 0.0
  %2491 = vmatpush2.msra.mxu0 0.0
  %2492 = vmatprep.subr.mxu0 0.0
  %2493 = vmatpush2.msra.mxu0 0.0
  %2494 = vmatprep.subr.mxu0 0.0
  %2495 = vmatpush2.msra.mxu0 0.0
  %2496 = vmatprep.subr.mxu0 0.0
  %2497 = vmatpush2.msra.mxu0 0.0
  %2498 = vmatprep.subr.mxu0 0.0
  %2499 = vmatpush2.msra.mxu0 0.0
  %2500 = vmatprep.subr.mxu0 0.0
  %2501 = vmatpush2.msra.mxu0 0.0
  %2502 = vmatprep.subr.mxu0 0.0
  %2503 = vmatpush2.msra.mxu0 0.0
  %2504 = vmatprep.subr.mxu0 0.0
  %2505 = vmatpush2.msra.mxu0 0.0
  %2506 = vmatprep.subr.mxu0 0.0
  %2507 = vmatpush2.msra.mxu0 0.0
  %2508 = vmatprep.subr.mxu0 0.0
  %2509 = vmatpush2.msra.mxu0 0.0
  %2510 = vmatprep.subr.mxu0 0.0
  %2511 = vmatpush2.msra.mxu0 0.0
  %2512 = vmatprep.subr.mxu0 0.0
  %2513 = vmatpush2.msra.mxu0 0.0
  %2514 = vmatprep.subr.mxu0 0.0
  %2515 = vmatpush2.msra.mxu0 0.0
  %2516 = vmatprep.mubr.f32.mxu0 0.0
  %2517 = vmatmul.mubr.f32.gmra.mxu0 %v2405
  %v2518 = vpop.f32.mrf.mxu0
  %v2519 = vadd.f32 %v2327, %v2518
  %v2520 = vpop.f32.mrf.mxu0
  %2521 = vmatprep.mubr.f32.mxu0 0.0
  %2522 = vmatmul.mubr.f32.gmra.mxu0 %v2408
  %v2523 = vpop.f32.mrf.mxu0
  %v2524 = vadd.f32 %v2332, %v2523
  %v2525 = vpop.f32.mrf.mxu0
  %2526 = vmatprep.mubr.f32.mxu0 0.0
  %2527 = vmatmul.mubr.f32.gmra.mxu0 %v2411
  %v2528 = vpop.f32.mrf.mxu0
  %v2529 = vadd.f32 %v2337, %v2528
  %v2530 = vpop.f32.mrf.mxu0
  %2531 = vmatprep.mubr.f32.mxu0 0.0
  %2532 = vmatmul.mubr.f32.gmra.mxu0 %v2414
  %v2533 = vpop.f32.mrf.mxu0
  %v2534 = vadd.f32 %v2342, %v2533
  %v2535 = vpop.f32.mrf.mxu0
  %2536 = vmatprep.mubr.f32.mxu0 0.0
  %2537 = vmatmul.mubr.f32.gmra.mxu0 %v2417
  %v2538 = vpop.f32.mrf.mxu0
  %v2539 = vadd.f32 %v2347, %v2538
  %v2540 = vpop.f32.mrf.mxu0
  %2541 = vmatprep.mubr.f32.mxu0 0.0
  %2542 = vmatmul.mubr.f32.gmra.mxu0 %v2420
  %v2543 = vpop.f32.mrf.mxu0
  %v2544 = vadd.f32 %v2352, %v2543
  %v2545 = vpop.f32.mrf.mxu0
  %2546 = vmatprep.mubr.f32.mxu0 0.0
  %2547 = vmatmul.mubr.f32.gmra.mxu0 %v2423
  %v2548 = vpop.f32.mrf.mxu0
  %v2549 = vadd.f32 %v2357, %v2548
  %v2550 = vpop.f32.mrf.mxu0
  %2551 = vmatprep.mubr.f32.mxu0 0.0
  %2552 = vmatmul.mubr.f32.gmra.mxu0 %v2426
  %v2553 = vpop.f32.mrf.mxu0
  %v2554 = vadd.f32 %v2362, %v2553
  %v2555 = vpop.f32.mrf.mxu0
  %2556 = vmatprep.mubr.f32.mxu0 0.0
  %2557 = vmatmul.mubr.f32.gmra.mxu0 %v2429
  %v2558 = vpop.f32.mrf.mxu0
  %v2559 = vadd.f32 %v2367, %v2558
  %v2560 = vpop.f32.mrf.mxu0
  %2561 = vmatprep.mubr.f32.mxu0 0.0
  %2562 = vmatmul.mubr.f32.gmra.mxu0 %v2432
  %v2563 = vpop.f32.mrf.mxu0
  %v2564 = vadd.f32 %v2372, %v2563
  %v2565 = vpop.f32.mrf.mxu0
  %2566 = vmatprep.mubr.f32.mxu0 0.0
  %2567 = vmatmul.mubr.f32.gmra.mxu0 %v2435
  %v2568 = vpop.f32.mrf.mxu0
  %v2569 = vadd.f32 %v2377, %v2568
  %v2570 = vpop.f32.mrf.mxu0
  %2571 = vmatprep.mubr.f32.mxu0 0.0
  %2572 = vmatmul.mubr.f32.gmra.mxu0 %v2438
  %v2573 = vpop.f32.mrf.mxu0
  %v2574 = vadd.f32 %v2382, %v2573
  %v2575 = vpop.f32.mrf.mxu0
  %2576 = vmatprep.mubr.f32.mxu0 0.0
  %2577 = vmatmul.mubr.f32.gmra.mxu0 %v2441
  %v2578 = vpop.f32.mrf.mxu0
  %v2579 = vadd.f32 %v2387, %v2578
  %v2580 = vpop.f32.mrf.mxu0
  %2581 = vmatprep.mubr.f32.mxu0 0.0
  %2582 = vmatmul.mubr.f32.gmra.mxu0 %v2444
  %v2583 = vpop.f32.mrf.mxu0
  %v2584 = vadd.f32 %v2392, %v2583
  %v2585 = vpop.f32.mrf.mxu0
  %2586 = vmatprep.mubr.f32.mxu0 0.0
  %2587 = vmatmul.mubr.f32.gmra.mxu0 %v2447
  %v2588 = vpop.f32.mrf.mxu0
  %v2589 = vadd.f32 %v2397, %v2588
  %v2590 = vpop.f32.mrf.mxu0
  %2591 = vmatprep.mubr.f32.mxu0 0.0
  %2592 = vmatmul.mubr.f32.gmra.mxu0 %v2450
  %v2593 = vpop.f32.mrf.mxu0
  %v2594 = vadd.f32 %v2402, %v2593
  %v2595 = vpop.f32.mrf.mxu0
  %2596 = vdwg.mxu0
  %s2597 = scalar_lea.vmem %s3, 896
  %2598 = vst.msk [vmem:[%s2597] sm:$0xff] %vm322, %v2519
  %2599 = vst.msk [vmem:[%s2597 + $0x8] sm:$0xff] %vm322, %v2524
  %2600 = vst.msk [vmem:[%s2597 + $0x10] sm:$0xff] %vm322, %v2529
  %2601 = vst.msk [vmem:[%s2597 + $0x18] sm:$0xff] %vm322, %v2534
  %2602 = vst.msk [vmem:[%s2597 + $0x20] sm:$0xff] %vm322, %v2539
  %2603 = vst.msk [vmem:[%s2597 + $0x28] sm:$0xff] %vm322, %v2544
  %2604 = vst.msk [vmem:[%s2597 + $0x30] sm:$0xff] %vm322, %v2549
  %2605 = vst.msk [vmem:[%s2597 + $0x38] sm:$0xff] %vm322, %v2554
  %2606 = vst.msk [vmem:[%s2597 + $0x40] sm:$0xff] %vm322, %v2559
  %2607 = vst.msk [vmem:[%s2597 + $0x48] sm:$0xff] %vm322, %v2564
  %2608 = vst.msk [vmem:[%s2597 + $0x50] sm:$0xff] %vm322, %v2569
  %2609 = vst.msk [vmem:[%s2597 + $0x58] sm:$0xff] %vm322, %v2574
  %2610 = vst.msk [vmem:[%s2597 + $0x60] sm:$0xff] %vm322, %v2579
  %2611 = vst.msk [vmem:[%s2597 + $0x68] sm:$0xff] %vm322, %v2584
  %2612 = vst.msk [vmem:[%s2597 + $0x70] sm:$0xff] %vm322, %v2589
  %2613 = vst.msk [vmem:[%s2597 + $0x78] sm:$0xff] %vm322, %v2594
  // Predicated region
  $region14: #{tpu_custom_call.1} parent=0 // pred_check
    _
  $region15: #{tpu_custom_call.1} parent=0 // pred_check_branch
    %2615 = sbr.rel (0) target = $region17
  $region16: #{tpu_custom_call.1} parent=0 // pred_region
    _
  $region17: #{tpu_custom_call.1} parent=0 // pred_fallthru
    _
  // Predicated region
  $region18: #{tpu_custom_call.1} parent=0 // pred_check
    _
  $region19: #{tpu_custom_call.1} parent=0 // pred_check_branch
    %2617 = sbr.rel (0) target = $region21
  $region20: #{tpu_custom_call.1} parent=0 // pred_region
    _
  $region21: #{tpu_custom_call.1} parent=0 // pred_fallthru
    _

</llo_original>
